<compile_context>
chip_gen: v5e
topology: v5e:2x2
jax: 0.10.0
libtpu: 0.0.40
codegen_flags: <defaults>
</compile_context>

<pallas_src>
import jax
import jax.numpy as jnp
import numpy as np
from jax.experimental import pallas as pl
from jax.experimental.pallas import tpu as pltpu

FILTER_SIZES = (2, 3, 4, 5)
FS_MAX = max(FILTER_SIZES)               # 5
N_FILTERS = 64
NUM_CH = len(FILTER_SIZES) * N_FILTERS   # 256 (lane-dense: 2 x 128)
BN_EPS = 1e-5


# --------------------------------------------------------------------------
# Kernel
# --------------------------------------------------------------------------
def textcnn_kernel(emb_ref, w_ref, scale_ref, bias_ref, mask_ref,
                   fcw_ref, fcb_ref, out_ref):
    """One batch tile of the fused TextCNN forward.

    emb_ref  : (LT, TB, E)       bf16  time-major embeddings, LT = L + 3
    w_ref    : (FS_MAX, E, 256)  bf16  packed conv weights, zero rows for s>=fs
    scale_ref: (1, 256)          f32   folded BN scale
    bias_ref : (1, 256)          f32   folded BN bias (includes conv bias)
    mask_ref : (LW, 1, 256)      f32   1.0 where the time position is valid
    fcw_ref  : (1, 256)          f32   FC weight row
    fcb_ref  : (1, 1)            f32   FC bias
    out_ref  : (TB, 1)           f32   logits
    """
    lt, tb, e = emb_ref.shape
    fs_max = w_ref.shape[0]
    nc = w_ref.shape[-1]
    lw = mask_ref.shape[0]
    rows = lw * tb

    # Flatten (time, batch) once; a shift by s is then a contiguous row range.
    x = emb_ref[...].reshape(lt * tb, e)                        # bf16

    # Convolution as a sum of FS_MAX shifted MXU matmuls, f32 accumulation:
    #   acc[t*b, c] = sum_s emb[t+s, b, :] @ w[s, :, c]
    acc = jnp.dot(x[0:rows], w_ref[0], preferred_element_type=jnp.float32)
    for s in range(1, fs_max):
        acc = acc + jnp.dot(x[s * tb:s * tb + rows], w_ref[s],
                            preferred_element_type=jnp.float32)

    # Folded BatchNorm affine + ReLU (f32, full-width 256-lane vregs).
    y = jnp.maximum(acc * scale_ref[...] + bias_ref[...], 0.0)

    # Zero invalid tail positions of the shorter-filter branches, then
    # max-pool over time (leading axis -> pure VPU maxima, no reshuffle).
    y3 = y.reshape(lw, tb, nc) * mask_ref[...]
    pooled = jnp.max(y3, axis=0)                                # (TB, 256)

    # Dropout(0.5) is identity in eval mode.
    # Final Linear(256 -> 1) on VPU/XLU: broadcast-mul + lane reduction.
    logits = jnp.sum(pooled * fcw_ref[...], axis=-1, keepdims=True) + fcb_ref[...]
    out_ref[...] = logits


# --------------------------------------------------------------------------
# Wrapper
# --------------------------------------------------------------------------
def _choose_batch_tile(B, LT, LW, E, NC, vmem_budget_bytes=20 * 1024 * 1024):
    """Pick a batch tile (multiple of 16 for bf16 sublane packing) that keeps
    the double-buffered embedding tile + f32 activation working set under
    budget (conservative: assume lane-padded embeddings and ~4 live f32
    activation copies), so it also fits v7x's smaller VMEM."""
    per_row = 16 * LT * E + 16 * LW * NC + 2048
    cap = max(16, (vmem_budget_bytes // max(per_row, 1)) // 16 * 16)
    cap = min(cap, 512)
    b16 = ((B + 15) // 16) * 16
    tb = min(cap, b16)
    b_pad = ((b16 + tb - 1) // tb) * tb
    return tb, b_pad


def textcnn_forward(emb, packed):
    """emb: (B, L, E) float32 embeddings; packed: dict from pack_kernel_params."""
    B, L, E = emb.shape
    assert L >= FS_MAX, "sequence must be at least as long as the largest filter"
    LW = L - 1                      # number of output positions of the fs=2 branch
    LT = L + FS_MAX - 2             # padded time so every shift has LW rows
    TB, B_pad = _choose_batch_tile(B, LT, LW, E, NUM_CH)

    # Time-major, zero-padded (time tail + batch tile grid), bf16 for the MXU.
    emb_t = jnp.transpose(emb, (1, 0, 2))                       # (L, B, E)
    emb_t = jnp.pad(emb_t, ((0, LT - L), (0, B_pad - B), (0, 0)))
    emb_t = emb_t.astype(jnp.bfloat16)                          # (LT, B_pad, E)

    # Per-(time, channel) validity mask: branch fs is valid for t <= L - fs.
    t_idx = jnp.arange(LW, dtype=jnp.int32)[:, None, None]
    fs_per_ch = jnp.repeat(jnp.asarray(FILTER_SIZES, jnp.int32),
                           N_FILTERS)[None, None, :]
    mask = (t_idx <= (L - fs_per_ch)).astype(jnp.float32)       # (LW, 1, 256)

    grid = (B_pad // TB,)
    flops = 2 * B_pad * LW * (FS_MAX * E) * NUM_CH
    bytes_accessed = (LT * B_pad * E * 2          # bf16 embeddings
                      + FS_MAX * E * NUM_CH * 2   # bf16 packed weights
                      + LW * NUM_CH * 4           # mask
                      + 4 * NUM_CH * 4            # scale/bias/fcw (+fcb)
                      + B_pad * 4)                # output

    out = pl.pallas_call(
        textcnn_kernel,
        out_shape=jax.ShapeDtypeStruct((B_pad, 1), jnp.float32),
        grid=grid,
        in_specs=[
            # per-tile embeddings (double-buffered by the Pallas pipeline)
            pl.BlockSpec((LT, TB, E), lambda i: (0, i, 0)),
            # weights / BN params / mask / FC stay VMEM-resident across steps
            pl.BlockSpec((FS_MAX, E, NUM_CH), lambda i: (0, 0, 0)),
            pl.BlockSpec((1, NUM_CH), lambda i: (0, 0)),
            pl.BlockSpec((1, NUM_CH), lambda i: (0, 0)),
            pl.BlockSpec((LW, 1, NUM_CH), lambda i: (0, 0, 0)),
            pl.BlockSpec((1, NUM_CH), lambda i: (0, 0)),
            pl.BlockSpec((1, 1), lambda i: (0, 0)),
        ],
        out_specs=pl.BlockSpec((TB, 1), lambda i: (i, 0)),
        compiler_params=pltpu.CompilerParams(
            dimension_semantics=("parallel",),          # v7x: 2 TensorCores
            vmem_limit_bytes=32 * 1024 * 1024),
        cost_estimate=pl.CostEstimate(flops=int(flops), transcendentals=0,
                                      bytes_accessed=int(bytes_accessed)),
    )(emb_t, packed["w"], packed["scale"], packed["bias"], mask,
      packed["fcw"], packed["fcb"])
    return out[:B]


# --------------------------------------------------------------------------
# Parameters
# --------------------------------------------------------------------------
def init_params(key, vocab_size, embedding_dim, pad_idx):
    """Deterministic synthetic parameters, matching the PyTorch module's shapes."""
    keys = jax.random.split(key, 32)
    ki = iter(keys)
    p = {}
    emb_table = 0.1 * jax.random.normal(next(ki), (vocab_size, embedding_dim),
                                        jnp.float32)
    p["embedding"] = emb_table.at[pad_idx].set(0.0)
    for fs in FILTER_SIZES:
        # PyTorch Conv2d weight layout: (out_c=64, in_c=1, kh=fs, kw=E)
        p[f"conv{fs}_w"] = 0.1 * jax.random.normal(
            next(ki), (N_FILTERS, 1, fs, embedding_dim), jnp.float32)
        p[f"conv{fs}_b"] = 0.05 * jax.random.normal(next(ki), (N_FILTERS,), jnp.float32)
        p[f"bn{fs}_gamma"] = 1.0 + 0.1 * jax.random.normal(next(ki), (N_FILTERS,), jnp.float32)
        p[f"bn{fs}_beta"] = 0.1 * jax.random.normal(next(ki), (N_FILTERS,), jnp.float32)
        p[f"bn{fs}_mean"] = 0.05 * jax.random.normal(next(ki), (N_FILTERS,), jnp.float32)
        p[f"bn{fs}_var"] = 1.0 + 0.1 * jax.random.uniform(next(ki), (N_FILTERS,), jnp.float32)
    # PyTorch Linear(4*64, 1): weight (1, 256), bias (1,)
    p["fc_w"] = 0.1 * jax.random.normal(next(ki), (1, NUM_CH), jnp.float32)
    p["fc_b"] = 0.05 * jax.random.normal(next(ki), (1,), jnp.float32)
    return p


def pack_kernel_params(p):
    """Pack the 4 conv branches into one shift-major, zero-padded
    (FS_MAX, E, 256) bf16 weight tensor and fold conv-bias + BatchNorm into
    one (1, 256) f32 scale/bias pair."""
    E = p["embedding"].shape[1]
    w_packed = jnp.zeros((FS_MAX, E, NUM_CH), jnp.float32)
    scale_parts, bias_parts = [], []
    for bi, fs in enumerate(FILTER_SIZES):
        wc = p[f"conv{fs}_w"][:, 0]                    # (64, fs, E)
        w_fs = jnp.transpose(wc, (1, 2, 0))            # (fs, E, 64): w[s,e,o]
        w_packed = w_packed.at[:fs, :, bi * N_FILTERS:(bi + 1) * N_FILTERS].set(w_fs)
        scale = p[f"bn{fs}_gamma"] / jnp.sqrt(p[f"bn{fs}_var"] + BN_EPS)
        bias = p[f"bn{fs}_beta"] + (p[f"conv{fs}_b"] - p[f"bn{fs}_mean"]) * scale
        scale_parts.append(scale)
        bias_parts.append(bias)
    return {
        "w": w_packed.astype(jnp.bfloat16),                          # (5, E, 256)
        "scale": jnp.concatenate(scale_parts).reshape(1, NUM_CH),    # f32
        "bias": jnp.concatenate(bias_parts).reshape(1, NUM_CH),      # f32
        "fcw": p["fc_w"].reshape(1, NUM_CH).astype(jnp.float32),
        "fcb": p["fc_b"].reshape(1, 1).astype(jnp.float32),
    }


# --------------------------------------------------------------------------
# Plain-JAX reference (PyTorch eval-mode forward)
# --------------------------------------------------------------------------
def reference_forward(tokens, p, quantize_matmul_inputs=True):
    """Matches the PyTorch forward; optionally applies the same bf16 rounding
    to the matmul inputs that the kernel uses (accumulation stays f32)."""
    emb = p["embedding"][tokens]                                     # (B, L, E)
    if quantize_matmul_inputs:
        emb = emb.astype(jnp.bfloat16).astype(jnp.float32)
    B, L, E = emb.shape
    pooled = []
    for fs in FILTER_SIZES:
        w = p[f"conv{fs}_w"][:, 0]                                   # (64, fs, E)
        if quantize_matmul_inputs:
            w = w.astype(jnp.bfloat16).astype(jnp.float32)
        lo = L - fs + 1
        wins = jnp.stack([emb[:, s:s + lo, :] for s in range(fs)], axis=2)
        conv = jnp.einsum("bwfe,ofe->bwo", wins, w) + p[f"conv{fs}_b"]
        scale = p[f"bn{fs}_gamma"] / jnp.sqrt(p[f"bn{fs}_var"] + BN_EPS)
        bn = (conv - p[f"bn{fs}_mean"]) * scale + p[f"bn{fs}_beta"]
        pooled.append(jnp.max(jnp.maximum(bn, 0.0), axis=1))         # (B, 64)
    feats = jnp.concatenate(pooled, axis=-1)
    # Dropout(0.5) is identity in eval mode.
    return feats @ p["fc_w"].T + p["fc_b"]


# --------------------------------------------------------------------------
if __name__ == "__main__":
    vocab_size, embedding_dim, pad_idx = 50, 32, 0
    batch, seq_len = 2, 16

    key = jax.random.PRNGKey(0)
    k_params, k_tokens = jax.random.split(key)
    params = init_params(k_params, vocab_size, embedding_dim, pad_idx)
    tokens = jax.random.randint(k_tokens, (batch, seq_len), 0, vocab_size)

    packed = pack_kernel_params(params)

    # TODO(synk): the nn.Embedding gather is data-dependent; it is done as JAX
    # glue outside the kernel (the kernel consumes embedded token vectors).
    @jax.jit
    def forward(tok):
        emb = params["embedding"][tok].astype(jnp.float32)           # (B, L, E)
        return textcnn_forward(emb, packed)

    out = jax.block_until_ready(forward(tokens))
    ref = jax.block_until_ready(reference_forward(tokens, params))
    np.testing.assert_allclose(np.asarray(out), np.asarray(ref),
                               rtol=1e-3, atol=1e-3)

    print("KERNEL_OK")
</pallas_src>

<mosaic_0001>
module attributes {stable_mosaic.version = 11 : i64} {
  func.func @textcnn_kernel(%arg0: i32, %arg1: memref<19x16x32xbf16, #tpu.memory_space<vmem>>, %arg2: memref<5x32x256xbf16, #tpu.memory_space<vmem>>, %arg3: memref<1x256xf32, #tpu.memory_space<vmem>>, %arg4: memref<1x256xf32, #tpu.memory_space<vmem>>, %arg5: memref<15x1x256xf32, #tpu.memory_space<vmem>>, %arg6: memref<1x256xf32, #tpu.memory_space<vmem>>, %arg7: memref<1x1xf32, #tpu.memory_space<vmem>>, %arg8: memref<16x1xf32, #tpu.memory_space<vmem>>) attributes {dimension_semantics = [#tpu.dimension_semantics<parallel>], iteration_bounds = array<i64: 1>, scalar_prefetch = 0 : i64, scratch_operands = 0 : i64, tpu.core_type = #tpu.core_type<tc>, window_params = [{transform_indices = @transform_0, window_bounds = array<i64: 19, 16, 32>}, {pipeline_mode = #tpu.pipeline_mode<synchronous>, transform_indices = @transform_1, window_bounds = array<i64: 5, 32, 256>}, {pipeline_mode = #tpu.pipeline_mode<synchronous>, transform_indices = @transform_2, window_bounds = array<i64: 1, 256>}, {pipeline_mode = #tpu.pipeline_mode<synchronous>, transform_indices = @transform_3, window_bounds = array<i64: 1, 256>}, {pipeline_mode = #tpu.pipeline_mode<synchronous>, transform_indices = @transform_4, window_bounds = array<i64: 15, 1, 256>}, {pipeline_mode = #tpu.pipeline_mode<synchronous>, transform_indices = @transform_5, window_bounds = array<i64: 1, 256>}, {pipeline_mode = #tpu.pipeline_mode<synchronous>, transform_indices = @transform_6, window_bounds = array<i64: 1, 1>}, {transform_indices = @transform_7, window_bounds = array<i64: 16, 1>}]} {
    %c0 = arith.constant 0 : index
    %c0_0 = arith.constant 0 : index
    %c0_1 = arith.constant 0 : index
    %0 = vector.load %arg1[%c0, %c0_0, %c0_1] : memref<19x16x32xbf16, #tpu.memory_space<vmem>>, vector<19x16x32xbf16>
    %1 = vector.shape_cast %0 : vector<19x16x32xbf16> to vector<304x32xbf16>
    %2 = vector.extract_strided_slice %1 {offsets = [0, 0], sizes = [240, 32], strides = [1, 1]} : vector<304x32xbf16> to vector<240x32xbf16>
    %c0_2 = arith.constant 0 : index
    %c0_3 = arith.constant 0 : index
    %c0_4 = arith.constant 0 : index
    %3 = vector.load %arg2[%c0_2, %c0_3, %c0_4] : memref<5x32x256xbf16, #tpu.memory_space<vmem>>, vector<1x32x256xbf16>
    %4 = vector.shape_cast %3 : vector<1x32x256xbf16> to vector<32x256xbf16>
    %cst = arith.constant dense<0.000000e+00> : vector<240x256xf32>
    %5 = tpu.matmul %2, %4, %cst {dimension_numbers = #tpu.dot_dimension_numbers<[1], [0], [0], [1], [0, 0, 1, 1], [], []>} : vector<240x32xbf16>, vector<32x256xbf16>, vector<240x256xf32> -> vector<240x256xf32>
    %6 = vector.extract_strided_slice %1 {offsets = [16, 0], sizes = [240, 32], strides = [1, 1]} : vector<304x32xbf16> to vector<240x32xbf16>
    %c1 = arith.constant 1 : index
    %c0_5 = arith.constant 0 : index
    %c0_6 = arith.constant 0 : index
    %7 = vector.load %arg2[%c1, %c0_5, %c0_6] : memref<5x32x256xbf16, #tpu.memory_space<vmem>>, vector<1x32x256xbf16>
    %8 = vector.shape_cast %7 : vector<1x32x256xbf16> to vector<32x256xbf16>
    %cst_7 = arith.constant dense<0.000000e+00> : vector<240x256xf32>
    %9 = tpu.matmul %6, %8, %cst_7 {dimension_numbers = #tpu.dot_dimension_numbers<[1], [0], [0], [1], [0, 0, 1, 1], [], []>} : vector<240x32xbf16>, vector<32x256xbf16>, vector<240x256xf32> -> vector<240x256xf32>
    %10 = arith.addf %5, %9 : vector<240x256xf32>
    %11 = vector.extract_strided_slice %1 {offsets = [32, 0], sizes = [240, 32], strides = [1, 1]} : vector<304x32xbf16> to vector<240x32xbf16>
    %c2 = arith.constant 2 : index
    %c0_8 = arith.constant 0 : index
    %c0_9 = arith.constant 0 : index
    %12 = vector.load %arg2[%c2, %c0_8, %c0_9] : memref<5x32x256xbf16, #tpu.memory_space<vmem>>, vector<1x32x256xbf16>
    %13 = vector.shape_cast %12 : vector<1x32x256xbf16> to vector<32x256xbf16>
    %cst_10 = arith.constant dense<0.000000e+00> : vector<240x256xf32>
    %14 = tpu.matmul %11, %13, %cst_10 {dimension_numbers = #tpu.dot_dimension_numbers<[1], [0], [0], [1], [0, 0, 1, 1], [], []>} : vector<240x32xbf16>, vector<32x256xbf16>, vector<240x256xf32> -> vector<240x256xf32>
    %15 = arith.addf %10, %14 : vector<240x256xf32>
    %16 = vector.extract_strided_slice %1 {offsets = [48, 0], sizes = [240, 32], strides = [1, 1]} : vector<304x32xbf16> to vector<240x32xbf16>
    %c3 = arith.constant 3 : index
    %c0_11 = arith.constant 0 : index
    %c0_12 = arith.constant 0 : index
    %17 = vector.load %arg2[%c3, %c0_11, %c0_12] : memref<5x32x256xbf16, #tpu.memory_space<vmem>>, vector<1x32x256xbf16>
    %18 = vector.shape_cast %17 : vector<1x32x256xbf16> to vector<32x256xbf16>
    %cst_13 = arith.constant dense<0.000000e+00> : vector<240x256xf32>
    %19 = tpu.matmul %16, %18, %cst_13 {dimension_numbers = #tpu.dot_dimension_numbers<[1], [0], [0], [1], [0, 0, 1, 1], [], []>} : vector<240x32xbf16>, vector<32x256xbf16>, vector<240x256xf32> -> vector<240x256xf32>
    %20 = arith.addf %15, %19 : vector<240x256xf32>
    %21 = vector.extract_strided_slice %1 {offsets = [64, 0], sizes = [240, 32], strides = [1, 1]} : vector<304x32xbf16> to vector<240x32xbf16>
    %c4 = arith.constant 4 : index
    %c0_14 = arith.constant 0 : index
    %c0_15 = arith.constant 0 : index
    %22 = vector.load %arg2[%c4, %c0_14, %c0_15] : memref<5x32x256xbf16, #tpu.memory_space<vmem>>, vector<1x32x256xbf16>
    %23 = vector.shape_cast %22 : vector<1x32x256xbf16> to vector<32x256xbf16>
    %cst_16 = arith.constant dense<0.000000e+00> : vector<240x256xf32>
    %24 = tpu.matmul %21, %23, %cst_16 {dimension_numbers = #tpu.dot_dimension_numbers<[1], [0], [0], [1], [0, 0, 1, 1], [], []>} : vector<240x32xbf16>, vector<32x256xbf16>, vector<240x256xf32> -> vector<240x256xf32>
    %25 = arith.addf %20, %24 : vector<240x256xf32>
    %c0_17 = arith.constant 0 : index
    %c0_18 = arith.constant 0 : index
    %26 = vector.load %arg3[%c0_17, %c0_18] : memref<1x256xf32, #tpu.memory_space<vmem>>, vector<1x256xf32>
    %27 = vector.broadcast %26 : vector<1x256xf32> to vector<240x256xf32>
    %28 = arith.mulf %25, %27 : vector<240x256xf32>
    %c0_19 = arith.constant 0 : index
    %c0_20 = arith.constant 0 : index
    %29 = vector.load %arg4[%c0_19, %c0_20] : memref<1x256xf32, #tpu.memory_space<vmem>>, vector<1x256xf32>
    %30 = vector.broadcast %29 : vector<1x256xf32> to vector<240x256xf32>
    %31 = arith.addf %28, %30 : vector<240x256xf32>
    %cst_21 = arith.constant 0.000000e+00 : f32
    %32 = vector.broadcast %cst_21 : f32 to vector<240x256xf32>
    %33 = arith.maximumf %31, %32 : vector<240x256xf32>
    %34 = vector.shape_cast %33 : vector<240x256xf32> to vector<15x16x256xf32>
    %c0_22 = arith.constant 0 : index
    %c0_23 = arith.constant 0 : index
    %c0_24 = arith.constant 0 : index
    %35 = vector.load %arg5[%c0_22, %c0_23, %c0_24] : memref<15x1x256xf32, #tpu.memory_space<vmem>>, vector<15x1x256xf32>
    %36 = vector.broadcast %35 : vector<15x1x256xf32> to vector<15x16x256xf32>
    %37 = arith.mulf %34, %36 : vector<15x16x256xf32>
    %cst_25 = arith.constant dense<0xFF800000> : vector<16x256xf32>
    %38 = vector.multi_reduction <maximumf>, %37, %cst_25 [0] : vector<15x16x256xf32> to vector<16x256xf32>
    %c0_26 = arith.constant 0 : index
    %c0_27 = arith.constant 0 : index
    %39 = vector.load %arg6[%c0_26, %c0_27] : memref<1x256xf32, #tpu.memory_space<vmem>>, vector<1x256xf32>
    %40 = vector.broadcast %39 : vector<1x256xf32> to vector<16x256xf32>
    %41 = arith.mulf %38, %40 : vector<16x256xf32>
    %cst_28 = arith.constant dense<0.000000e+00> : vector<16xf32>
    %42 = vector.multi_reduction <add>, %41, %cst_28 [1] : vector<16x256xf32> to vector<16xf32>
    %43 = vector.shape_cast %42 : vector<16xf32> to vector<16x1xf32>
    %c0_29 = arith.constant 0 : index
    %c0_30 = arith.constant 0 : index
    %44 = vector.load %arg7[%c0_29, %c0_30] : memref<1x1xf32, #tpu.memory_space<vmem>>, vector<1x1xf32>
    %45 = vector.broadcast %44 : vector<1x1xf32> to vector<16x1xf32>
    %46 = arith.addf %43, %45 : vector<16x1xf32>
    %c0_31 = arith.constant 0 : index
    %c0_32 = arith.constant 0 : index
    %47 = vector.load %arg8[%c0_31, %c0_32] : memref<16x1xf32, #tpu.memory_space<vmem>>, vector<16x1xf32>
    tpu.vector_store %arg8[%c0_31, %c0_32], %46 {strides = array<i32>} : memref<16x1xf32, #tpu.memory_space<vmem>>, vector<16x1xf32>,
    return
  }
  func.func @transform_0(%arg0: i32) -> (i32, i32, i32) {
    %c0_i32 = arith.constant 0 : i32
    %c0_i32_0 = arith.constant 0 : i32
    %c0_i32_1 = arith.constant 0 : i32
    return %c0_i32, %arg0, %c0_i32_0 : i32, i32, i32
  }
  func.func @transform_1(%arg0: i32) -> (i32, i32, i32) {
    %c0_i32 = arith.constant 0 : i32
    %c0_i32_0 = arith.constant 0 : i32
    %c0_i32_1 = arith.constant 0 : i32
    %c0_i32_2 = arith.constant 0 : i32
    return %c0_i32, %c0_i32_0, %c0_i32_1 : i32, i32, i32
  }
  func.func @transform_2(%arg0: i32) -> (i32, i32) {
    %c0_i32 = arith.constant 0 : i32
    %c0_i32_0 = arith.constant 0 : i32
    %c0_i32_1 = arith.constant 0 : i32
    return %c0_i32, %c0_i32_0 : i32, i32
  }
  func.func @transform_3(%arg0: i32) -> (i32, i32) {
    %c0_i32 = arith.constant 0 : i32
    %c0_i32_0 = arith.constant 0 : i32
    %c0_i32_1 = arith.constant 0 : i32
    return %c0_i32, %c0_i32_0 : i32, i32
  }
  func.func @transform_4(%arg0: i32) -> (i32, i32, i32) {
    %c0_i32 = arith.constant 0 : i32
    %c0_i32_0 = arith.constant 0 : i32
    %c0_i32_1 = arith.constant 0 : i32
    %c0_i32_2 = arith.constant 0 : i32
    return %c0_i32, %c0_i32_0, %c0_i32_1 : i32, i32, i32
  }
  func.func @transform_5(%arg0: i32) -> (i32, i32) {
    %c0_i32 = arith.constant 0 : i32
    %c0_i32_0 = arith.constant 0 : i32
    %c0_i32_1 = arith.constant 0 : i32
    return %c0_i32, %c0_i32_0 : i32, i32
  }
  func.func @transform_6(%arg0: i32) -> (i32, i32) {
    %c0_i32 = arith.constant 0 : i32
    %c0_i32_0 = arith.constant 0 : i32
    %c0_i32_1 = arith.constant 0 : i32
    return %c0_i32, %c0_i32_0 : i32, i32
  }
  func.func @transform_7(%arg0: i32) -> (i32, i32) {
    %c0_i32 = arith.constant 0 : i32
    %c0_i32_0 = arith.constant 0 : i32
    return %arg0, %c0_i32 : i32, i32
  }
}

</mosaic_0001>

<llo_original>
// kernel: forward.1
$region0: #{forward.1}
  #allocation0 [shape = 'u32[]', space=smem, size = 0x4, offset = 0x4, fixed_abs, tag = 'smem constant byte address 0x4 - core index']
  #allocation1 [shape = 'u32[72,128]{1,0:T(1,128)}', space=vmem, size = 0x9000, scoped, tag = 'internal scratch']
  #allocation2 [shape = 'f32[1,1]{1,0:T(1,128)S(1)}', space=vmem, size = 0x200, scoped, tag = 'scoped memory for forward.1']
  %s0 = inlined_call_operand.vmem [shape: bf16[19,16,32], index: 0, kind: input, shape index: {}]
  %s1 = inlined_call_operand.vmem [shape: bf16[5,32,256], index: 1, kind: input, shape index: {}]
  %s2 = inlined_call_operand.vmem [shape: f32[1,256], index: 2, kind: input, shape index: {}]
  %s3 = inlined_call_operand.vmem [shape: f32[1,256], index: 3, kind: input, shape index: {}]
  %s4 = inlined_call_operand.vmem [shape: f32[15,1,256], index: 4, kind: input, shape index: {}]
  %s5 = inlined_call_operand.vmem [shape: f32[1,256], index: 5, kind: input, shape index: {}]
  %s6 = inlined_call_operand.<no memory space> [shape: f32[1,1], index: 6, kind: input, shape index: {}]
  %s7 = inlined_call_operand.vmem [shape: f32[16,1], index: 7, kind: output, shape index: {}]
  %s8 = sld [smem:[#allocation0]]
  $region38: #{forward.1} parent=0
    _
  %s10 = ssub.s32 1, %s8
  %s11 = scalar_select 0, %s10, %s8
  %v12 = vstv %s6
  %13 = vst [vmem:[#allocation2] sm:$0x1] %v12
  // Predicated region
  $region2: #{forward.1} parent=0 // pred_check
    _
  $region3: #{forward.1} parent=0 // pred_check_branch
    %15 = sbr.rel (0) target = $region5
  $region4: #{forward.1} parent=0 // pred_region
    _
  $region5: #{forward.1} parent=0 // pred_fallthru
    _
  // Predicated region
  $region6: #{forward.1} parent=0 // pred_check
    _
  $region7: #{forward.1} parent=0 // pred_check_branch
    %17 = sbr.rel (0) target = $region9
  $region8: #{forward.1} parent=0 // pred_region
    _
  $region9: #{forward.1} parent=0 // pred_fallthru
    _
  // Predicated region
  $region10: #{forward.1} parent=0 // pred_check
    _
  $region11: #{forward.1} parent=0 // pred_check_branch
    %19 = sbr.rel (0) target = $region13
  $region12: #{forward.1} parent=0 // pred_region
    _
  $region13: #{forward.1} parent=0 // pred_fallthru
    _
  // Predicated region
  $region14: #{forward.1} parent=0 // pred_check
    _
  $region15: #{forward.1} parent=0 // pred_check_branch
    %21 = sbr.rel (0) target = $region17
  $region16: #{forward.1} parent=0 // pred_region
    _
  $region17: #{forward.1} parent=0 // pred_fallthru
    _
  // Predicated region
  $region18: #{forward.1} parent=0 // pred_check
    _
  $region19: #{forward.1} parent=0 // pred_check_branch
    %23 = sbr.rel (0) target = $region21
  $region20: #{forward.1} parent=0 // pred_region
    _
  $region21: #{forward.1} parent=0 // pred_fallthru
    _
  // Predicated region
  $region22: #{forward.1} parent=0 // pred_check
    _
  $region23: #{forward.1} parent=0 // pred_check_branch
    %25 = sbr.rel (0) target = $region25
  $region24: #{forward.1} parent=0 // pred_region
    _
  $region25: #{forward.1} parent=0 // pred_fallthru
    _
  // Predicated region
  $region26: #{forward.1} parent=0 // pred_check
    _
  $region27: #{forward.1} parent=0 // pred_check_branch
    %27 = sbr.rel (0) target = $region29
  $region28: #{forward.1} parent=0 // pred_region
    _
  $region29: #{forward.1} parent=0 // pred_fallthru
    _
  %v29 = vld [vmem:[%s0] sm:$0xf]
  %v30 = vld [vmem:[%s0 + $0x4] sm:$0xf]
  %v31 = vld [vmem:[%s0 + $0x8] sm:$0xf]
  %v32 = vld [vmem:[%s0 + $0xc] sm:$0xf]
  %v33 = vld [vmem:[%s0 + $0x10] sm:$0xf]
  %v34 = vld [vmem:[%s0 + $0x14] sm:$0xf]
  %v35 = vld [vmem:[%s0 + $0x18] sm:$0xf]
  %v36 = vld [vmem:[%s0 + $0x1c] sm:$0xf]
  %v37 = vld [vmem:[%s0 + $0x20] sm:$0xf]
  %v38 = vld [vmem:[%s0 + $0x24] sm:$0xf]
  %v39 = vld [vmem:[%s0 + $0x28] sm:$0xf]
  %v40 = vld [vmem:[%s0 + $0x2c] sm:$0xf]
  %v41 = vld [vmem:[%s0 + $0x30] sm:$0xf]
  %v42 = vld [vmem:[%s0 + $0x34] sm:$0xf]
  %v43 = vld [vmem:[%s0 + $0x38] sm:$0xf]
  %v44 = vld [vmem:[%s0 + $0x3c] sm:$0xf]
  %v45 = vld [vmem:[%s0 + $0x40] sm:$0xf]
  %v46 = vld [vmem:[%s0 + $0x44] sm:$0xf]
  %v47 = vld [vmem:[%s0 + $0x48] sm:$0xf]
  %v48 = vld [vmem:[%s0 + $0x4c] sm:$0xf]
  %v49 = vld [vmem:[%s0 + $0x50] sm:$0xf]
  %v50 = vld [vmem:[%s0 + $0x54] sm:$0xf]
  %v51 = vld [vmem:[%s0 + $0x58] sm:$0xf]
  %v52 = vld [vmem:[%s0 + $0x5c] sm:$0xf]
  %v53 = vld [vmem:[%s0 + $0x60] sm:$0xf]
  %v54 = vld [vmem:[%s0 + $0x64] sm:$0xf]
  %v55 = vld [vmem:[%s0 + $0x68] sm:$0xf]
  %v56 = vld [vmem:[%s0 + $0x6c] sm:$0xf]
  %v57 = vld [vmem:[%s0 + $0x70] sm:$0xf]
  %v58 = vld [vmem:[%s0 + $0x74] sm:$0xf]
  %v59 = vld [vmem:[%s0 + $0x78] sm:$0xf]
  %v60 = vld [vmem:[%s0 + $0x7c] sm:$0xf]
  %v61 = vld [vmem:[%s0 + $0x80] sm:$0xf]
  %v62 = vld [vmem:[%s0 + $0x84] sm:$0xf]
  %v63 = vld [vmem:[%s0 + $0x88] sm:$0xf]
  %v64 = vld [vmem:[%s0 + $0x8c] sm:$0xf]
  %v65 = vld [vmem:[%s0 + $0x90] sm:$0xf]
  %v66 = vld [vmem:[%s0 + $0x94] sm:$0xf]
  %v67 = vld [vmem:[%s1] sm:$0xff]
  %v68 = vld [vmem:[%s1 + $0x8] sm:$0xff]
  %v69 = vld [vmem:[%s1 + $0x10] sm:$0xff]
  %v70 = vld [vmem:[%s1 + $0x18] sm:$0xff]
  %s71 = scalar_lea.vmem %s1, 32
  %v72 = vld [vmem:[%s71] sm:$0xff]
  %v73 = vld [vmem:[%s71 + $0x8] sm:$0xff]
  %v74 = vld [vmem:[%s71 + $0x10] sm:$0xff]
  %v75 = vld [vmem:[%s71 + $0x18] sm:$0xff]
  %v106 = vunpack.c.l.b16 %v31
  %v107 = vunpack.c.l.b16 %v32
  %v108 = vunpack.c.l.b16 %v33
  %v109 = vunpack.c.l.b16 %v34
  %v110 = vunpack.c.l.b16 %v35
  %v111 = vunpack.c.l.b16 %v36
  %v112 = vunpack.c.l.b16 %v37
  %v113 = vunpack.c.l.b16 %v38
  %v114 = vunpack.c.l.b16 %v39
  %v115 = vunpack.c.l.b16 %v40
  %v116 = vunpack.c.l.b16 %v41
  %v117 = vunpack.c.l.b16 %v42
  %v118 = vunpack.c.l.b16 %v43
  %v119 = vunpack.c.l.b16 %v44
  %v120 = vunpack.c.l.b16 %v45
  %v121 = vunpack.c.l.b16 %v46
  %v122 = vunpack.c.l.b16 %v47
  %v123 = vunpack.c.l.b16 %v48
  %v124 = vunpack.c.l.b16 %v49
  %v125 = vunpack.c.l.b16 %v50
  %v126 = vunpack.c.l.b16 %v51
  %v127 = vunpack.c.l.b16 %v52
  %v128 = vunpack.c.l.b16 %v53
  %v129 = vunpack.c.l.b16 %v54
  %v130 = vunpack.c.l.b16 %v55
  %v131 = vunpack.c.l.b16 %v56
  %v132 = vunpack.c.l.b16 %v57
  %v133 = vunpack.c.l.b16 %v58
  %v134 = vunpack.c.l.b16 %v59
  %v135 = vunpack.c.l.b16 %v60
  %v136 = vpack.c.b16 %v107, %v106
  %v137 = vpack.c.b16 %v109, %v108
  %v138 = vpack.c.b16 %v111, %v110
  %v139 = vpack.c.b16 %v113, %v112
  %v140 = vpack.c.b16 %v115, %v114
  %v141 = vpack.c.b16 %v117, %v116
  %v142 = vpack.c.b16 %v119, %v118
  %v143 = vpack.c.b16 %v121, %v120
  %v144 = vpack.c.b16 %v123, %v122
  %v145 = vpack.c.b16 %v125, %v124
  %v146 = vpack.c.b16 %v127, %v126
  %v147 = vpack.c.b16 %v129, %v128
  %v148 = vpack.c.b16 %v131, %v130
  %v149 = vpack.c.b16 %v133, %v132
  %v150 = vpack.c.b16 %v135, %v134
  %v155 = vunpack.c.l.b16 %v72
  %v156 = vunpack.c.h.b16 %v72
  %v157 = vunpack.c.l.b16 %v73
  %v158 = vunpack.c.h.b16 %v73
  %v159 = vunpack.c.l.b16 %v74
  %v160 = vunpack.c.h.b16 %v74
  %v161 = vunpack.c.l.b16 %v75
  %v162 = vunpack.c.h.b16 %v75
  %v163 = vpack.c.b16 %v157, %v155
  %v164 = vpack.c.b16 %v158, %v156
  %v165 = vpack.c.b16 %v161, %v159
  %v166 = vpack.c.b16 %v162, %v160
  %vm171 = vcmask 261120
  %v173 = vsel %vm171, %v136, 0
  %v176 = vsel %vm171, %v137, 0
  %v179 = vsel %vm171, %v138, 0
  %v182 = vsel %vm171, %v139, 0
  %v185 = vsel %vm171, %v140, 0
  %v188 = vsel %vm171, %v141, 0
  %v191 = vsel %vm171, %v142, 0
  %v194 = vsel %vm171, %v143, 0
  %v197 = vsel %vm171, %v144, 0
  %v200 = vsel %vm171, %v145, 0
  %v203 = vsel %vm171, %v146, 0
  %v206 = vsel %vm171, %v147, 0
  %v209 = vsel %vm171, %v148, 0
  %v212 = vsel %vm171, %v149, 0
  %v215 = vsel %vm171, %v150, 0
  %217 = vmatpush.bf16.msra.mxu0 0
  %218 = vmatpush.bf16.msra.mxu0 0
  %219 = vmatpush.bf16.msra.mxu0 0
  %220 = vmatpush.bf16.msra.mxu0 0
  %221 = vmatpush.bf16.msra.mxu0 0
  %222 = vmatpush.bf16.msra.mxu0 0
  %223 = vmatpush.bf16.msra.mxu0 %v165
  %224 = vmatpush.bf16.msra.mxu0 %v163
  %225 = vmatmul.bf16.gmra.mxu0 %v173
  %v226 = vpop.f32.mrf.mxu0
  %v227 = vadd.f32 0.0, %v226
  %v228 = vpop.f32.mrf.mxu0
  %v229 = vadd.f32 0.0, %v228
  %230 = vmatmul.bf16.gmra.mxu0 %v176
  %v231 = vpop.f32.mrf.mxu0
  %v232 = vadd.f32 0.0, %v231
  %v233 = vpop.f32.mrf.mxu0
  %v234 = vadd.f32 0.0, %v233
  %235 = vmatmul.bf16.gmra.mxu0 %v179
  %v236 = vpop.f32.mrf.mxu0
  %v237 = vadd.f32 0.0, %v236
  %v238 = vpop.f32.mrf.mxu0
  %v239 = vadd.f32 0.0, %v238
  %240 = vmatmul.bf16.gmra.mxu0 %v182
  %v241 = vpop.f32.mrf.mxu0
  %v242 = vadd.f32 0.0, %v241
  %v243 = vpop.f32.mrf.mxu0
  %v244 = vadd.f32 0.0, %v243
  %245 = vmatmul.bf16.gmra.mxu0 %v185
  %v246 = vpop.f32.mrf.mxu0
  %v247 = vadd.f32 0.0, %v246
  %v248 = vpop.f32.mrf.mxu0
  %v249 = vadd.f32 0.0, %v248
  %250 = vmatmul.bf16.gmra.mxu0 %v188
  %v251 = vpop.f32.mrf.mxu0
  %v252 = vadd.f32 0.0, %v251
  %v253 = vpop.f32.mrf.mxu0
  %v254 = vadd.f32 0.0, %v253
  %255 = vmatmul.bf16.gmra.mxu0 %v191
  %v256 = vpop.f32.mrf.mxu0
  %v257 = vadd.f32 0.0, %v256
  %v258 = vpop.f32.mrf.mxu0
  %v259 = vadd.f32 0.0, %v258
  %260 = vmatmul.bf16.gmra.mxu0 %v194
  %v261 = vpop.f32.mrf.mxu0
  %v262 = vadd.f32 0.0, %v261
  %v263 = vpop.f32.mrf.mxu0
  %v264 = vadd.f32 0.0, %v263
  %265 = vmatmul.bf16.gmra.mxu0 %v197
  %v266 = vpop.f32.mrf.mxu0
  %v267 = vadd.f32 0.0, %v266
  %v268 = vpop.f32.mrf.mxu0
  %v269 = vadd.f32 0.0, %v268
  %270 = vmatmul.bf16.gmra.mxu0 %v200
  %v271 = vpop.f32.mrf.mxu0
  %v272 = vadd.f32 0.0, %v271
  %v273 = vpop.f32.mrf.mxu0
  %v274 = vadd.f32 0.0, %v273
  %275 = vmatmul.bf16.gmra.mxu0 %v203
  %v276 = vpop.f32.mrf.mxu0
  %v277 = vadd.f32 0.0, %v276
  %v278 = vpop.f32.mrf.mxu0
  %v279 = vadd.f32 0.0, %v278
  %280 = vmatmul.bf16.gmra.mxu0 %v206
  %v281 = vpop.f32.mrf.mxu0
  %v282 = vadd.f32 0.0, %v281
  %v283 = vpop.f32.mrf.mxu0
  %v284 = vadd.f32 0.0, %v283
  %285 = vmatmul.bf16.gmra.mxu0 %v209
  %v286 = vpop.f32.mrf.mxu0
  %v287 = vadd.f32 0.0, %v286
  %v288 = vpop.f32.mrf.mxu0
  %v289 = vadd.f32 0.0, %v288
  %290 = vmatmul.bf16.gmra.mxu0 %v212
  %v291 = vpop.f32.mrf.mxu0
  %v292 = vadd.f32 0.0, %v291
  %v293 = vpop.f32.mrf.mxu0
  %v294 = vadd.f32 0.0, %v293
  %295 = vmatmul.bf16.gmra.mxu0 %v215
  %v296 = vpop.f32.mrf.mxu0
  %v297 = vadd.f32 0.0, %v296
  %v298 = vpop.f32.mrf.mxu0
  %v299 = vadd.f32 0.0, %v298
  %300 = vdwg.mxu0
  %301 = vmatpush.bf16.msra.mxu0 0
  %302 = vmatpush.bf16.msra.mxu0 0
  %303 = vmatpush.bf16.msra.mxu0 0
  %304 = vmatpush.bf16.msra.mxu0 0
  %305 = vmatpush.bf16.msra.mxu0 0
  %306 = vmatpush.bf16.msra.mxu0 0
  %307 = vmatpush.bf16.msra.mxu0 %v166
  %308 = vmatpush.bf16.msra.mxu0 %v164
  %309 = vmatmul.bf16.gmra.mxu0 %v173
  %v310 = vpop.f32.mrf.mxu0
  %v311 = vadd.f32 0.0, %v310
  %v312 = vpop.f32.mrf.mxu0
  %v313 = vadd.f32 0.0, %v312
  %314 = vmatmul.bf16.gmra.mxu0 %v176
  %v315 = vpop.f32.mrf.mxu0
  %v316 = vadd.f32 0.0, %v315
  %v317 = vpop.f32.mrf.mxu0
  %v318 = vadd.f32 0.0, %v317
  %319 = vmatmul.bf16.gmra.mxu0 %v179
  %v320 = vpop.f32.mrf.mxu0
  %v321 = vadd.f32 0.0, %v320
  %v322 = vpop.f32.mrf.mxu0
  %v323 = vadd.f32 0.0, %v322
  %324 = vmatmul.bf16.gmra.mxu0 %v182
  %v325 = vpop.f32.mrf.mxu0
  %v326 = vadd.f32 0.0, %v325
  %v327 = vpop.f32.mrf.mxu0
  %v328 = vadd.f32 0.0, %v327
  %329 = vmatmul.bf16.gmra.mxu0 %v185
  %v330 = vpop.f32.mrf.mxu0
  %v331 = vadd.f32 0.0, %v330
  %v332 = vpop.f32.mrf.mxu0
  %v333 = vadd.f32 0.0, %v332
  %334 = vmatmul.bf16.gmra.mxu0 %v188
  %v335 = vpop.f32.mrf.mxu0
  %v336 = vadd.f32 0.0, %v335
  %v337 = vpop.f32.mrf.mxu0
  %v338 = vadd.f32 0.0, %v337
  %339 = vmatmul.bf16.gmra.mxu0 %v191
  %v340 = vpop.f32.mrf.mxu0
  %v341 = vadd.f32 0.0, %v340
  %v342 = vpop.f32.mrf.mxu0
  %v343 = vadd.f32 0.0, %v342
  %344 = vmatmul.bf16.gmra.mxu0 %v194
  %v345 = vpop.f32.mrf.mxu0
  %v346 = vadd.f32 0.0, %v345
  %v347 = vpop.f32.mrf.mxu0
  %v348 = vadd.f32 0.0, %v347
  %349 = vmatmul.bf16.gmra.mxu0 %v197
  %v350 = vpop.f32.mrf.mxu0
  %v351 = vadd.f32 0.0, %v350
  %v352 = vpop.f32.mrf.mxu0
  %v353 = vadd.f32 0.0, %v352
  %354 = vmatmul.bf16.gmra.mxu0 %v200
  %v355 = vpop.f32.mrf.mxu0
  %v356 = vadd.f32 0.0, %v355
  %v357 = vpop.f32.mrf.mxu0
  %v358 = vadd.f32 0.0, %v357
  %359 = vmatmul.bf16.gmra.mxu0 %v203
  %v360 = vpop.f32.mrf.mxu0
  %v361 = vadd.f32 0.0, %v360
  %v362 = vpop.f32.mrf.mxu0
  %v363 = vadd.f32 0.0, %v362
  %364 = vmatmul.bf16.gmra.mxu0 %v206
  %v365 = vpop.f32.mrf.mxu0
  %v366 = vadd.f32 0.0, %v365
  %v367 = vpop.f32.mrf.mxu0
  %v368 = vadd.f32 0.0, %v367
  %369 = vmatmul.bf16.gmra.mxu0 %v209
  %v370 = vpop.f32.mrf.mxu0
  %v371 = vadd.f32 0.0, %v370
  %v372 = vpop.f32.mrf.mxu0
  %v373 = vadd.f32 0.0, %v372
  %374 = vmatmul.bf16.gmra.mxu0 %v212
  %v375 = vpop.f32.mrf.mxu0
  %v376 = vadd.f32 0.0, %v375
  %v377 = vpop.f32.mrf.mxu0
  %v378 = vadd.f32 0.0, %v377
  %379 = vmatmul.bf16.gmra.mxu0 %v215
  %v380 = vpop.f32.mrf.mxu0
  %v381 = vadd.f32 0.0, %v380
  %v382 = vpop.f32.mrf.mxu0
  %v383 = vadd.f32 0.0, %v382
  %384 = vdwg.mxu0
  %v387 = vunpack.c.l.b16 %v29
  %v388 = vunpack.c.l.b16 %v30
  %v389 = vpack.c.b16 %v388, %v387
  %v394 = vunpack.c.l.b16 %v67
  %v395 = vunpack.c.h.b16 %v67
  %v396 = vunpack.c.l.b16 %v68
  %v397 = vunpack.c.h.b16 %v68
  %v398 = vunpack.c.l.b16 %v69
  %v399 = vunpack.c.h.b16 %v69
  %v400 = vunpack.c.l.b16 %v70
  %v401 = vunpack.c.h.b16 %v70
  %v402 = vpack.c.b16 %v396, %v394
  %v403 = vpack.c.b16 %v397, %v395
  %v404 = vpack.c.b16 %v400, %v398
  %v405 = vpack.c.b16 %v401, %v399
  %v411 = vsel %vm171, %v389, 0
  %413 = vmatpush.bf16.msra.mxu0 0
  %414 = vmatpush.bf16.msra.mxu0 0
  %415 = vmatpush.bf16.msra.mxu0 0
  %416 = vmatpush.bf16.msra.mxu0 0
  %417 = vmatpush.bf16.msra.mxu0 0
  %418 = vmatpush.bf16.msra.mxu0 0
  %419 = vmatpush.bf16.msra.mxu0 %v404
  %420 = vmatpush.bf16.msra.mxu0 %v402
  %421 = vmatmul.bf16.gmra.mxu0 %v411
  %v422 = vpop.f32.mrf.mxu0
  %v423 = vadd.f32 %v227, %v422
  %v424 = vpop.f32.mrf.mxu0
  %v425 = vadd.f32 %v229, %v424
  %426 = vmatmul.bf16.gmra.mxu0 %v173
  %v427 = vpop.f32.mrf.mxu0
  %v428 = vadd.f32 %v232, %v427
  %v429 = vpop.f32.mrf.mxu0
  %v430 = vadd.f32 %v234, %v429
  %431 = vmatmul.bf16.gmra.mxu0 %v176
  %v432 = vpop.f32.mrf.mxu0
  %v433 = vadd.f32 %v237, %v432
  %v434 = vpop.f32.mrf.mxu0
  %v435 = vadd.f32 %v239, %v434
  %436 = vmatmul.bf16.gmra.mxu0 %v179
  %v437 = vpop.f32.mrf.mxu0
  %v438 = vadd.f32 %v242, %v437
  %v439 = vpop.f32.mrf.mxu0
  %v440 = vadd.f32 %v244, %v439
  %441 = vmatmul.bf16.gmra.mxu0 %v182
  %v442 = vpop.f32.mrf.mxu0
  %v443 = vadd.f32 %v247, %v442
  %v444 = vpop.f32.mrf.mxu0
  %v445 = vadd.f32 %v249, %v444
  %446 = vmatmul.bf16.gmra.mxu0 %v185
  %v447 = vpop.f32.mrf.mxu0
  %v448 = vadd.f32 %v252, %v447
  %v449 = vpop.f32.mrf.mxu0
  %v450 = vadd.f32 %v254, %v449
  %451 = vmatmul.bf16.gmra.mxu0 %v188
  %v452 = vpop.f32.mrf.mxu0
  %v453 = vadd.f32 %v257, %v452
  %v454 = vpop.f32.mrf.mxu0
  %v455 = vadd.f32 %v259, %v454
  %456 = vmatmul.bf16.gmra.mxu0 %v191
  %v457 = vpop.f32.mrf.mxu0
  %v458 = vadd.f32 %v262, %v457
  %v459 = vpop.f32.mrf.mxu0
  %v460 = vadd.f32 %v264, %v459
  %461 = vmatmul.bf16.gmra.mxu0 %v194
  %v462 = vpop.f32.mrf.mxu0
  %v463 = vadd.f32 %v267, %v462
  %v464 = vpop.f32.mrf.mxu0
  %v465 = vadd.f32 %v269, %v464
  %466 = vmatmul.bf16.gmra.mxu0 %v197
  %v467 = vpop.f32.mrf.mxu0
  %v468 = vadd.f32 %v272, %v467
  %v469 = vpop.f32.mrf.mxu0
  %v470 = vadd.f32 %v274, %v469
  %471 = vmatmul.bf16.gmra.mxu0 %v200
  %v472 = vpop.f32.mrf.mxu0
  %v473 = vadd.f32 %v277, %v472
  %v474 = vpop.f32.mrf.mxu0
  %v475 = vadd.f32 %v279, %v474
  %476 = vmatmul.bf16.gmra.mxu0 %v203
  %v477 = vpop.f32.mrf.mxu0
  %v478 = vadd.f32 %v282, %v477
  %v479 = vpop.f32.mrf.mxu0
  %v480 = vadd.f32 %v284, %v479
  %481 = vmatmul.bf16.gmra.mxu0 %v206
  %v482 = vpop.f32.mrf.mxu0
  %v483 = vadd.f32 %v287, %v482
  %v484 = vpop.f32.mrf.mxu0
  %v485 = vadd.f32 %v289, %v484
  %486 = vmatmul.bf16.gmra.mxu0 %v209
  %v487 = vpop.f32.mrf.mxu0
  %v488 = vadd.f32 %v292, %v487
  %v489 = vpop.f32.mrf.mxu0
  %v490 = vadd.f32 %v294, %v489
  %491 = vmatmul.bf16.gmra.mxu0 %v212
  %v492 = vpop.f32.mrf.mxu0
  %v493 = vadd.f32 %v297, %v492
  %v494 = vpop.f32.mrf.mxu0
  %v495 = vadd.f32 %v299, %v494
  %496 = vdwg.mxu0
  %497 = vmatpush.bf16.msra.mxu0 0
  %498 = vmatpush.bf16.msra.mxu0 0
  %499 = vmatpush.bf16.msra.mxu0 0
  %500 = vmatpush.bf16.msra.mxu0 0
  %501 = vmatpush.bf16.msra.mxu0 0
  %502 = vmatpush.bf16.msra.mxu0 0
  %503 = vmatpush.bf16.msra.mxu0 %v405
  %504 = vmatpush.bf16.msra.mxu0 %v403
  %505 = vmatmul.bf16.gmra.mxu0 %v411
  %v506 = vpop.f32.mrf.mxu0
  %v507 = vadd.f32 %v311, %v506
  %v508 = vpop.f32.mrf.mxu0
  %v509 = vadd.f32 %v313, %v508
  %510 = vmatmul.bf16.gmra.mxu0 %v173
  %v511 = vpop.f32.mrf.mxu0
  %v512 = vadd.f32 %v316, %v511
  %v513 = vpop.f32.mrf.mxu0
  %v514 = vadd.f32 %v318, %v513
  %515 = vmatmul.bf16.gmra.mxu0 %v176
  %v516 = vpop.f32.mrf.mxu0
  %v517 = vadd.f32 %v321, %v516
  %v518 = vpop.f32.mrf.mxu0
  %v519 = vadd.f32 %v323, %v518
  %520 = vmatmul.bf16.gmra.mxu0 %v179
  %v521 = vpop.f32.mrf.mxu0
  %v522 = vadd.f32 %v326, %v521
  %v523 = vpop.f32.mrf.mxu0
  %v524 = vadd.f32 %v328, %v523
  %525 = vmatmul.bf16.gmra.mxu0 %v182
  %v526 = vpop.f32.mrf.mxu0
  %v527 = vadd.f32 %v331, %v526
  %v528 = vpop.f32.mrf.mxu0
  %v529 = vadd.f32 %v333, %v528
  %530 = vmatmul.bf16.gmra.mxu0 %v185
  %v531 = vpop.f32.mrf.mxu0
  %v532 = vadd.f32 %v336, %v531
  %v533 = vpop.f32.mrf.mxu0
  %v534 = vadd.f32 %v338, %v533
  %535 = vmatmul.bf16.gmra.mxu0 %v188
  %v536 = vpop.f32.mrf.mxu0
  %v537 = vadd.f32 %v341, %v536
  %v538 = vpop.f32.mrf.mxu0
  %v539 = vadd.f32 %v343, %v538
  %540 = vmatmul.bf16.gmra.mxu0 %v191
  %v541 = vpop.f32.mrf.mxu0
  %v542 = vadd.f32 %v346, %v541
  %v543 = vpop.f32.mrf.mxu0
  %v544 = vadd.f32 %v348, %v543
  %545 = vmatmul.bf16.gmra.mxu0 %v194
  %v546 = vpop.f32.mrf.mxu0
  %v547 = vadd.f32 %v351, %v546
  %v548 = vpop.f32.mrf.mxu0
  %v549 = vadd.f32 %v353, %v548
  %550 = vmatmul.bf16.gmra.mxu0 %v197
  %v551 = vpop.f32.mrf.mxu0
  %v552 = vadd.f32 %v356, %v551
  %v553 = vpop.f32.mrf.mxu0
  %v554 = vadd.f32 %v358, %v553
  %555 = vmatmul.bf16.gmra.mxu0 %v200
  %v556 = vpop.f32.mrf.mxu0
  %v557 = vadd.f32 %v361, %v556
  %v558 = vpop.f32.mrf.mxu0
  %v559 = vadd.f32 %v363, %v558
  %560 = vmatmul.bf16.gmra.mxu0 %v203
  %v561 = vpop.f32.mrf.mxu0
  %v562 = vadd.f32 %v366, %v561
  %v563 = vpop.f32.mrf.mxu0
  %v564 = vadd.f32 %v368, %v563
  %565 = vmatmul.bf16.gmra.mxu0 %v206
  %v566 = vpop.f32.mrf.mxu0
  %v567 = vadd.f32 %v371, %v566
  %v568 = vpop.f32.mrf.mxu0
  %v569 = vadd.f32 %v373, %v568
  %570 = vmatmul.bf16.gmra.mxu0 %v209
  %v571 = vpop.f32.mrf.mxu0
  %v572 = vadd.f32 %v376, %v571
  %v573 = vpop.f32.mrf.mxu0
  %v574 = vadd.f32 %v378, %v573
  %575 = vmatmul.bf16.gmra.mxu0 %v212
  %v576 = vpop.f32.mrf.mxu0
  %v577 = vadd.f32 %v381, %v576
  %v578 = vpop.f32.mrf.mxu0
  %v579 = vadd.f32 %v383, %v578
  %580 = vdwg.mxu0
  %s581 = scalar_lea.vmem %s1, 64
  %v582 = vld [vmem:[%s581] sm:$0xff]
  %v583 = vld [vmem:[%s581 + $0x8] sm:$0xff]
  %v584 = vld [vmem:[%s581 + $0x10] sm:$0xff]
  %v585 = vld [vmem:[%s581 + $0x18] sm:$0xff]
  %v588 = vunpack.c.l.b16 %v61
  %v589 = vunpack.c.l.b16 %v62
  %v590 = vpack.c.b16 %v589, %v588
  %v595 = vunpack.c.l.b16 %v582
  %v596 = vunpack.c.h.b16 %v582
  %v597 = vunpack.c.l.b16 %v583
  %v598 = vunpack.c.h.b16 %v583
  %v599 = vunpack.c.l.b16 %v584
  %v600 = vunpack.c.h.b16 %v584
  %v601 = vunpack.c.l.b16 %v585
  %v602 = vunpack.c.h.b16 %v585
  %v603 = vpack.c.b16 %v597, %v595
  %v604 = vpack.c.b16 %v598, %v596
  %v605 = vpack.c.b16 %v601, %v599
  %v606 = vpack.c.b16 %v602, %v600
  %v612 = vsel %vm171, %v590, 0
  %614 = vmatpush.bf16.msra.mxu0 0
  %615 = vmatpush.bf16.msra.mxu0 0
  %616 = vmatpush.bf16.msra.mxu0 0
  %617 = vmatpush.bf16.msra.mxu0 0
  %618 = vmatpush.bf16.msra.mxu0 0
  %619 = vmatpush.bf16.msra.mxu0 0
  %620 = vmatpush.bf16.msra.mxu0 %v605
  %621 = vmatpush.bf16.msra.mxu0 %v603
  %622 = vmatmul.bf16.gmra.mxu0 %v176
  %v623 = vpop.f32.mrf.mxu0
  %v624 = vadd.f32 0.0, %v623
  %v625 = vpop.f32.mrf.mxu0
  %v626 = vadd.f32 0.0, %v625
  %627 = vmatmul.bf16.gmra.mxu0 %v179
  %v628 = vpop.f32.mrf.mxu0
  %v629 = vadd.f32 0.0, %v628
  %v630 = vpop.f32.mrf.mxu0
  %v631 = vadd.f32 0.0, %v630
  %632 = vmatmul.bf16.gmra.mxu0 %v182
  %v633 = vpop.f32.mrf.mxu0
  %v634 = vadd.f32 0.0, %v633
  %v635 = vpop.f32.mrf.mxu0
  %v636 = vadd.f32 0.0, %v635
  %637 = vmatmul.bf16.gmra.mxu0 %v185
  %v638 = vpop.f32.mrf.mxu0
  %v639 = vadd.f32 0.0, %v638
  %v640 = vpop.f32.mrf.mxu0
  %v641 = vadd.f32 0.0, %v640
  %642 = vmatmul.bf16.gmra.mxu0 %v188
  %v643 = vpop.f32.mrf.mxu0
  %v644 = vadd.f32 0.0, %v643
  %v645 = vpop.f32.mrf.mxu0
  %v646 = vadd.f32 0.0, %v645
  %647 = vmatmul.bf16.gmra.mxu0 %v191
  %v648 = vpop.f32.mrf.mxu0
  %v649 = vadd.f32 0.0, %v648
  %v650 = vpop.f32.mrf.mxu0
  %v651 = vadd.f32 0.0, %v650
  %652 = vmatmul.bf16.gmra.mxu0 %v194
  %v653 = vpop.f32.mrf.mxu0
  %v654 = vadd.f32 0.0, %v653
  %v655 = vpop.f32.mrf.mxu0
  %v656 = vadd.f32 0.0, %v655
  %657 = vmatmul.bf16.gmra.mxu0 %v197
  %v658 = vpop.f32.mrf.mxu0
  %v659 = vadd.f32 0.0, %v658
  %v660 = vpop.f32.mrf.mxu0
  %v661 = vadd.f32 0.0, %v660
  %662 = vmatmul.bf16.gmra.mxu0 %v200
  %v663 = vpop.f32.mrf.mxu0
  %v664 = vadd.f32 0.0, %v663
  %v665 = vpop.f32.mrf.mxu0
  %v666 = vadd.f32 0.0, %v665
  %667 = vmatmul.bf16.gmra.mxu0 %v203
  %v668 = vpop.f32.mrf.mxu0
  %v669 = vadd.f32 0.0, %v668
  %v670 = vpop.f32.mrf.mxu0
  %v671 = vadd.f32 0.0, %v670
  %672 = vmatmul.bf16.gmra.mxu0 %v206
  %v673 = vpop.f32.mrf.mxu0
  %v674 = vadd.f32 0.0, %v673
  %v675 = vpop.f32.mrf.mxu0
  %v676 = vadd.f32 0.0, %v675
  %677 = vmatmul.bf16.gmra.mxu0 %v209
  %v678 = vpop.f32.mrf.mxu0
  %v679 = vadd.f32 0.0, %v678
  %v680 = vpop.f32.mrf.mxu0
  %v681 = vadd.f32 0.0, %v680
  %682 = vmatmul.bf16.gmra.mxu0 %v212
  %v683 = vpop.f32.mrf.mxu0
  %v684 = vadd.f32 0.0, %v683
  %v685 = vpop.f32.mrf.mxu0
  %v686 = vadd.f32 0.0, %v685
  %687 = vmatmul.bf16.gmra.mxu0 %v215
  %v688 = vpop.f32.mrf.mxu0
  %v689 = vadd.f32 0.0, %v688
  %v690 = vpop.f32.mrf.mxu0
  %v691 = vadd.f32 0.0, %v690
  %692 = vmatmul.bf16.gmra.mxu0 %v612
  %v693 = vpop.f32.mrf.mxu0
  %v694 = vadd.f32 0.0, %v693
  %v695 = vpop.f32.mrf.mxu0
  %v696 = vadd.f32 0.0, %v695
  %697 = vdwg.mxu0
  %698 = vmatpush.bf16.msra.mxu0 0
  %699 = vmatpush.bf16.msra.mxu0 0
  %700 = vmatpush.bf16.msra.mxu0 0
  %701 = vmatpush.bf16.msra.mxu0 0
  %702 = vmatpush.bf16.msra.mxu0 0
  %703 = vmatpush.bf16.msra.mxu0 0
  %704 = vmatpush.bf16.msra.mxu0 %v606
  %705 = vmatpush.bf16.msra.mxu0 %v604
  %706 = vmatmul.bf16.gmra.mxu0 %v176
  %v707 = vpop.f32.mrf.mxu0
  %v708 = vadd.f32 0.0, %v707
  %v709 = vpop.f32.mrf.mxu0
  %v710 = vadd.f32 0.0, %v709
  %711 = vmatmul.bf16.gmra.mxu0 %v179
  %v712 = vpop.f32.mrf.mxu0
  %v713 = vadd.f32 0.0, %v712
  %v714 = vpop.f32.mrf.mxu0
  %v715 = vadd.f32 0.0, %v714
  %716 = vmatmul.bf16.gmra.mxu0 %v182
  %v717 = vpop.f32.mrf.mxu0
  %v718 = vadd.f32 0.0, %v717
  %v719 = vpop.f32.mrf.mxu0
  %v720 = vadd.f32 0.0, %v719
  %721 = vmatmul.bf16.gmra.mxu0 %v185
  %v722 = vpop.f32.mrf.mxu0
  %v723 = vadd.f32 0.0, %v722
  %v724 = vpop.f32.mrf.mxu0
  %v725 = vadd.f32 0.0, %v724
  %726 = vmatmul.bf16.gmra.mxu0 %v188
  %v727 = vpop.f32.mrf.mxu0
  %v728 = vadd.f32 0.0, %v727
  %v729 = vpop.f32.mrf.mxu0
  %v730 = vadd.f32 0.0, %v729
  %731 = vmatmul.bf16.gmra.mxu0 %v191
  %v732 = vpop.f32.mrf.mxu0
  %v733 = vadd.f32 0.0, %v732
  %v734 = vpop.f32.mrf.mxu0
  %v735 = vadd.f32 0.0, %v734
  %736 = vmatmul.bf16.gmra.mxu0 %v194
  %v737 = vpop.f32.mrf.mxu0
  %v738 = vadd.f32 0.0, %v737
  %v739 = vpop.f32.mrf.mxu0
  %v740 = vadd.f32 0.0, %v739
  %741 = vmatmul.bf16.gmra.mxu0 %v197
  %v742 = vpop.f32.mrf.mxu0
  %v743 = vadd.f32 0.0, %v742
  %v744 = vpop.f32.mrf.mxu0
  %v745 = vadd.f32 0.0, %v744
  %746 = vmatmul.bf16.gmra.mxu0 %v200
  %v747 = vpop.f32.mrf.mxu0
  %v748 = vadd.f32 0.0, %v747
  %v749 = vpop.f32.mrf.mxu0
  %v750 = vadd.f32 0.0, %v749
  %751 = vmatmul.bf16.gmra.mxu0 %v203
  %v752 = vpop.f32.mrf.mxu0
  %v753 = vadd.f32 0.0, %v752
  %v754 = vpop.f32.mrf.mxu0
  %v755 = vadd.f32 0.0, %v754
  %756 = vmatmul.bf16.gmra.mxu0 %v206
  %v757 = vpop.f32.mrf.mxu0
  %v758 = vadd.f32 0.0, %v757
  %v759 = vpop.f32.mrf.mxu0
  %v760 = vadd.f32 0.0, %v759
  %761 = vmatmul.bf16.gmra.mxu0 %v209
  %v762 = vpop.f32.mrf.mxu0
  %v763 = vadd.f32 0.0, %v762
  %v764 = vpop.f32.mrf.mxu0
  %v765 = vadd.f32 0.0, %v764
  %766 = vmatmul.bf16.gmra.mxu0 %v212
  %v767 = vpop.f32.mrf.mxu0
  %v768 = vadd.f32 0.0, %v767
  %v769 = vpop.f32.mrf.mxu0
  %v770 = vadd.f32 0.0, %v769
  %771 = vmatmul.bf16.gmra.mxu0 %v215
  %v772 = vpop.f32.mrf.mxu0
  %v773 = vadd.f32 0.0, %v772
  %v774 = vpop.f32.mrf.mxu0
  %v775 = vadd.f32 0.0, %v774
  %776 = vmatmul.bf16.gmra.mxu0 %v612
  %v777 = vpop.f32.mrf.mxu0
  %v778 = vadd.f32 0.0, %v777
  %v779 = vpop.f32.mrf.mxu0
  %v780 = vadd.f32 0.0, %v779
  %781 = vdwg.mxu0
  %v782 = vadd.f32 %v423, %v624
  %v783 = vadd.f32 %v507, %v708
  %v784 = vadd.f32 %v425, %v626
  %v785 = vadd.f32 %v509, %v710
  %v786 = vadd.f32 %v428, %v629
  %v787 = vadd.f32 %v512, %v713
  %v788 = vadd.f32 %v430, %v631
  %v789 = vadd.f32 %v514, %v715
  %v790 = vadd.f32 %v433, %v634
  %v791 = vadd.f32 %v517, %v718
  %v792 = vadd.f32 %v435, %v636
  %v793 = vadd.f32 %v519, %v720
  %v794 = vadd.f32 %v438, %v639
  %v795 = vadd.f32 %v522, %v723
  %v796 = vadd.f32 %v440, %v641
  %v797 = vadd.f32 %v524, %v725
  %v798 = vadd.f32 %v443, %v644
  %v799 = vadd.f32 %v527, %v728
  %v800 = vadd.f32 %v445, %v646
  %v801 = vadd.f32 %v529, %v730
  %v802 = vadd.f32 %v448, %v649
  %v803 = vadd.f32 %v532, %v733
  %v804 = vadd.f32 %v450, %v651
  %v805 = vadd.f32 %v534, %v735
  %v806 = vadd.f32 %v453, %v654
  %v807 = vadd.f32 %v537, %v738
  %v808 = vadd.f32 %v455, %v656
  %v809 = vadd.f32 %v539, %v740
  %v810 = vadd.f32 %v458, %v659
  %v811 = vadd.f32 %v542, %v743
  %v812 = vadd.f32 %v460, %v661
  %v813 = vadd.f32 %v544, %v745
  %v814 = vadd.f32 %v463, %v664
  %v815 = vadd.f32 %v547, %v748
  %v816 = vadd.f32 %v465, %v666
  %v817 = vadd.f32 %v549, %v750
  %v818 = vadd.f32 %v468, %v669
  %v819 = vadd.f32 %v552, %v753
  %v820 = vadd.f32 %v470, %v671
  %v821 = vadd.f32 %v554, %v755
  %v822 = vadd.f32 %v473, %v674
  %v823 = vadd.f32 %v557, %v758
  %v824 = vadd.f32 %v475, %v676
  %v825 = vadd.f32 %v559, %v760
  %v826 = vadd.f32 %v478, %v679
  %v827 = vadd.f32 %v562, %v763
  %v828 = vadd.f32 %v480, %v681
  %v829 = vadd.f32 %v564, %v765
  %v830 = vadd.f32 %v483, %v684
  %v831 = vadd.f32 %v567, %v768
  %v832 = vadd.f32 %v485, %v686
  %v833 = vadd.f32 %v569, %v770
  %v834 = vadd.f32 %v488, %v689
  %v835 = vadd.f32 %v572, %v773
  %v836 = vadd.f32 %v490, %v691
  %v837 = vadd.f32 %v574, %v775
  %v838 = vadd.f32 %v493, %v694
  %v839 = vadd.f32 %v577, %v778
  %v840 = vadd.f32 %v495, %v696
  %v841 = vadd.f32 %v579, %v780
  %s842 = scalar_lea.vmem %s1, 96
  %v843 = vld [vmem:[%s842] sm:$0xff]
  %v844 = vld [vmem:[%s842 + $0x8] sm:$0xff]
  %v845 = vld [vmem:[%s842 + $0x10] sm:$0xff]
  %v846 = vld [vmem:[%s842 + $0x18] sm:$0xff]
  %v849 = vunpack.c.l.b16 %v63
  %v850 = vunpack.c.l.b16 %v64
  %v851 = vpack.c.b16 %v850, %v849
  %v856 = vunpack.c.l.b16 %v843
  %v857 = vunpack.c.h.b16 %v843
  %v858 = vunpack.c.l.b16 %v844
  %v859 = vunpack.c.h.b16 %v844
  %v860 = vunpack.c.l.b16 %v845
  %v861 = vunpack.c.h.b16 %v845
  %v862 = vunpack.c.l.b16 %v846
  %v863 = vunpack.c.h.b16 %v846
  %v864 = vpack.c.b16 %v858, %v856
  %v865 = vpack.c.b16 %v859, %v857
  %v866 = vpack.c.b16 %v862, %v860
  %v867 = vpack.c.b16 %v863, %v861
  %v873 = vsel %vm171, %v851, 0
  %875 = vmatpush.bf16.msra.mxu0 0
  %876 = vmatpush.bf16.msra.mxu0 0
  %877 = vmatpush.bf16.msra.mxu0 0
  %878 = vmatpush.bf16.msra.mxu0 0
  %879 = vmatpush.bf16.msra.mxu0 0
  %880 = vmatpush.bf16.msra.mxu0 0
  %881 = vmatpush.bf16.msra.mxu0 %v866
  %882 = vmatpush.bf16.msra.mxu0 %v864
  %883 = vmatmul.bf16.gmra.mxu0 %v179
  %v884 = vpop.f32.mrf.mxu0
  %v885 = vadd.f32 0.0, %v884
  %v886 = vpop.f32.mrf.mxu0
  %v887 = vadd.f32 0.0, %v886
  %888 = vmatmul.bf16.gmra.mxu0 %v182
  %v889 = vpop.f32.mrf.mxu0
  %v890 = vadd.f32 0.0, %v889
  %v891 = vpop.f32.mrf.mxu0
  %v892 = vadd.f32 0.0, %v891
  %893 = vmatmul.bf16.gmra.mxu0 %v185
  %v894 = vpop.f32.mrf.mxu0
  %v895 = vadd.f32 0.0, %v894
  %v896 = vpop.f32.mrf.mxu0
  %v897 = vadd.f32 0.0, %v896
  %898 = vmatmul.bf16.gmra.mxu0 %v188
  %v899 = vpop.f32.mrf.mxu0
  %v900 = vadd.f32 0.0, %v899
  %v901 = vpop.f32.mrf.mxu0
  %v902 = vadd.f32 0.0, %v901
  %903 = vmatmul.bf16.gmra.mxu0 %v191
  %v904 = vpop.f32.mrf.mxu0
  %v905 = vadd.f32 0.0, %v904
  %v906 = vpop.f32.mrf.mxu0
  %v907 = vadd.f32 0.0, %v906
  %908 = vmatmul.bf16.gmra.mxu0 %v194
  %v909 = vpop.f32.mrf.mxu0
  %v910 = vadd.f32 0.0, %v909
  %v911 = vpop.f32.mrf.mxu0
  %v912 = vadd.f32 0.0, %v911
  %913 = vmatmul.bf16.gmra.mxu0 %v197
  %v914 = vpop.f32.mrf.mxu0
  %v915 = vadd.f32 0.0, %v914
  %v916 = vpop.f32.mrf.mxu0
  %v917 = vadd.f32 0.0, %v916
  %918 = vmatmul.bf16.gmra.mxu0 %v200
  %v919 = vpop.f32.mrf.mxu0
  %v920 = vadd.f32 0.0, %v919
  %v921 = vpop.f32.mrf.mxu0
  %v922 = vadd.f32 0.0, %v921
  %923 = vmatmul.bf16.gmra.mxu0 %v203
  %v924 = vpop.f32.mrf.mxu0
  %v925 = vadd.f32 0.0, %v924
  %v926 = vpop.f32.mrf.mxu0
  %v927 = vadd.f32 0.0, %v926
  %928 = vmatmul.bf16.gmra.mxu0 %v206
  %v929 = vpop.f32.mrf.mxu0
  %v930 = vadd.f32 0.0, %v929
  %v931 = vpop.f32.mrf.mxu0
  %v932 = vadd.f32 0.0, %v931
  %933 = vmatmul.bf16.gmra.mxu0 %v209
  %v934 = vpop.f32.mrf.mxu0
  %v935 = vadd.f32 0.0, %v934
  %v936 = vpop.f32.mrf.mxu0
  %v937 = vadd.f32 0.0, %v936
  %938 = vmatmul.bf16.gmra.mxu0 %v212
  %v939 = vpop.f32.mrf.mxu0
  %v940 = vadd.f32 0.0, %v939
  %v941 = vpop.f32.mrf.mxu0
  %v942 = vadd.f32 0.0, %v941
  %943 = vmatmul.bf16.gmra.mxu0 %v215
  %v944 = vpop.f32.mrf.mxu0
  %v945 = vadd.f32 0.0, %v944
  %v946 = vpop.f32.mrf.mxu0
  %v947 = vadd.f32 0.0, %v946
  %948 = vmatmul.bf16.gmra.mxu0 %v612
  %v949 = vpop.f32.mrf.mxu0
  %v950 = vadd.f32 0.0, %v949
  %v951 = vpop.f32.mrf.mxu0
  %v952 = vadd.f32 0.0, %v951
  %953 = vmatmul.bf16.gmra.mxu0 %v873
  %v954 = vpop.f32.mrf.mxu0
  %v955 = vadd.f32 0.0, %v954
  %v956 = vpop.f32.mrf.mxu0
  %v957 = vadd.f32 0.0, %v956
  %958 = vdwg.mxu0
  %959 = vmatpush.bf16.msra.mxu0 0
  %960 = vmatpush.bf16.msra.mxu0 0
  %961 = vmatpush.bf16.msra.mxu0 0
  %962 = vmatpush.bf16.msra.mxu0 0
  %963 = vmatpush.bf16.msra.mxu0 0
  %964 = vmatpush.bf16.msra.mxu0 0
  %965 = vmatpush.bf16.msra.mxu0 %v867
  %966 = vmatpush.bf16.msra.mxu0 %v865
  %967 = vmatmul.bf16.gmra.mxu0 %v179
  %v968 = vpop.f32.mrf.mxu0
  %v969 = vadd.f32 0.0, %v968
  %v970 = vpop.f32.mrf.mxu0
  %v971 = vadd.f32 0.0, %v970
  %972 = vmatmul.bf16.gmra.mxu0 %v182
  %v973 = vpop.f32.mrf.mxu0
  %v974 = vadd.f32 0.0, %v973
  %v975 = vpop.f32.mrf.mxu0
  %v976 = vadd.f32 0.0, %v975
  %977 = vmatmul.bf16.gmra.mxu0 %v185
  %v978 = vpop.f32.mrf.mxu0
  %v979 = vadd.f32 0.0, %v978
  %v980 = vpop.f32.mrf.mxu0
  %v981 = vadd.f32 0.0, %v980
  %982 = vmatmul.bf16.gmra.mxu0 %v188
  %v983 = vpop.f32.mrf.mxu0
  %v984 = vadd.f32 0.0, %v983
  %v985 = vpop.f32.mrf.mxu0
  %v986 = vadd.f32 0.0, %v985
  %987 = vmatmul.bf16.gmra.mxu0 %v191
  %v988 = vpop.f32.mrf.mxu0
  %v989 = vadd.f32 0.0, %v988
  %v990 = vpop.f32.mrf.mxu0
  %v991 = vadd.f32 0.0, %v990
  %992 = vmatmul.bf16.gmra.mxu0 %v194
  %v993 = vpop.f32.mrf.mxu0
  %v994 = vadd.f32 0.0, %v993
  %v995 = vpop.f32.mrf.mxu0
  %v996 = vadd.f32 0.0, %v995
  %997 = vmatmul.bf16.gmra.mxu0 %v197
  %v998 = vpop.f32.mrf.mxu0
  %v999 = vadd.f32 0.0, %v998
  %v1000 = vpop.f32.mrf.mxu0
  %v1001 = vadd.f32 0.0, %v1000
  %1002 = vmatmul.bf16.gmra.mxu0 %v200
  %v1003 = vpop.f32.mrf.mxu0
  %v1004 = vadd.f32 0.0, %v1003
  %v1005 = vpop.f32.mrf.mxu0
  %v1006 = vadd.f32 0.0, %v1005
  %1007 = vmatmul.bf16.gmra.mxu0 %v203
  %v1008 = vpop.f32.mrf.mxu0
  %v1009 = vadd.f32 0.0, %v1008
  %v1010 = vpop.f32.mrf.mxu0
  %v1011 = vadd.f32 0.0, %v1010
  %1012 = vmatmul.bf16.gmra.mxu0 %v206
  %v1013 = vpop.f32.mrf.mxu0
  %v1014 = vadd.f32 0.0, %v1013
  %v1015 = vpop.f32.mrf.mxu0
  %v1016 = vadd.f32 0.0, %v1015
  %1017 = vmatmul.bf16.gmra.mxu0 %v209
  %v1018 = vpop.f32.mrf.mxu0
  %v1019 = vadd.f32 0.0, %v1018
  %v1020 = vpop.f32.mrf.mxu0
  %v1021 = vadd.f32 0.0, %v1020
  %1022 = vmatmul.bf16.gmra.mxu0 %v212
  %v1023 = vpop.f32.mrf.mxu0
  %v1024 = vadd.f32 0.0, %v1023
  %v1025 = vpop.f32.mrf.mxu0
  %v1026 = vadd.f32 0.0, %v1025
  %1027 = vmatmul.bf16.gmra.mxu0 %v215
  %v1028 = vpop.f32.mrf.mxu0
  %v1029 = vadd.f32 0.0, %v1028
  %v1030 = vpop.f32.mrf.mxu0
  %v1031 = vadd.f32 0.0, %v1030
  %1032 = vmatmul.bf16.gmra.mxu0 %v612
  %v1033 = vpop.f32.mrf.mxu0
  %v1034 = vadd.f32 0.0, %v1033
  %v1035 = vpop.f32.mrf.mxu0
  %v1036 = vadd.f32 0.0, %v1035
  %1037 = vmatmul.bf16.gmra.mxu0 %v873
  %v1038 = vpop.f32.mrf.mxu0
  %v1039 = vadd.f32 0.0, %v1038
  %v1040 = vpop.f32.mrf.mxu0
  %v1041 = vadd.f32 0.0, %v1040
  %1042 = vdwg.mxu0
  %v1043 = vadd.f32 %v782, %v885
  %v1044 = vadd.f32 %v783, %v969
  %v1045 = vadd.f32 %v784, %v887
  %v1046 = vadd.f32 %v785, %v971
  %v1047 = vadd.f32 %v786, %v890
  %v1048 = vadd.f32 %v787, %v974
  %v1049 = vadd.f32 %v788, %v892
  %v1050 = vadd.f32 %v789, %v976
  %v1051 = vadd.f32 %v790, %v895
  %v1052 = vadd.f32 %v791, %v979
  %v1053 = vadd.f32 %v792, %v897
  %v1054 = vadd.f32 %v793, %v981
  %v1055 = vadd.f32 %v794, %v900
  %v1056 = vadd.f32 %v795, %v984
  %v1057 = vadd.f32 %v796, %v902
  %v1058 = vadd.f32 %v797, %v986
  %v1059 = vadd.f32 %v798, %v905
  %v1060 = vadd.f32 %v799, %v989
  %v1061 = vadd.f32 %v800, %v907
  %v1062 = vadd.f32 %v801, %v991
  %v1063 = vadd.f32 %v802, %v910
  %v1064 = vadd.f32 %v803, %v994
  %v1065 = vadd.f32 %v804, %v912
  %v1066 = vadd.f32 %v805, %v996
  %v1067 = vadd.f32 %v806, %v915
  %v1068 = vadd.f32 %v807, %v999
  %v1069 = vadd.f32 %v808, %v917
  %v1070 = vadd.f32 %v809, %v1001
  %v1071 = vadd.f32 %v810, %v920
  %v1072 = vadd.f32 %v811, %v1004
  %v1073 = vadd.f32 %v812, %v922
  %v1074 = vadd.f32 %v813, %v1006
  %v1075 = vadd.f32 %v814, %v925
  %v1076 = vadd.f32 %v815, %v1009
  %v1077 = vadd.f32 %v816, %v927
  %v1078 = vadd.f32 %v817, %v1011
  %v1079 = vadd.f32 %v818, %v930
  %v1080 = vadd.f32 %v819, %v1014
  %v1081 = vadd.f32 %v820, %v932
  %v1082 = vadd.f32 %v821, %v1016
  %v1083 = vadd.f32 %v822, %v935
  %v1084 = vadd.f32 %v823, %v1019
  %v1085 = vadd.f32 %v824, %v937
  %v1086 = vadd.f32 %v825, %v1021
  %v1087 = vadd.f32 %v826, %v940
  %v1088 = vadd.f32 %v827, %v1024
  %v1089 = vadd.f32 %v828, %v942
  %v1090 = vadd.f32 %v829, %v1026
  %v1091 = vadd.f32 %v830, %v945
  %v1092 = vadd.f32 %v831, %v1029
  %v1093 = vadd.f32 %v832, %v947
  %v1094 = vadd.f32 %v833, %v1031
  %v1095 = vadd.f32 %v834, %v950
  %v1096 = vadd.f32 %v835, %v1034
  %v1097 = vadd.f32 %v836, %v952
  %v1098 = vadd.f32 %v837, %v1036
  %v1099 = vadd.f32 %v838, %v955
  %v1100 = vadd.f32 %v839, %v1039
  %v1101 = vadd.f32 %v840, %v957
  %v1102 = vadd.f32 %v841, %v1041
  %s1103 = scalar_lea.vmem %s1, 128
  %v1104 = vld [vmem:[%s1103] sm:$0xff]
  %v1105 = vld [vmem:[%s1103 + $0x8] sm:$0xff]
  %v1106 = vld [vmem:[%s1103 + $0x10] sm:$0xff]
  %v1107 = vld [vmem:[%s1103 + $0x18] sm:$0xff]
  %v1110 = vunpack.c.l.b16 %v65
  %v1111 = vunpack.c.l.b16 %v66
  %v1112 = vpack.c.b16 %v1111, %v1110
  %v1117 = vunpack.c.l.b16 %v1104
  %v1118 = vunpack.c.h.b16 %v1104
  %v1119 = vunpack.c.l.b16 %v1105
  %v1120 = vunpack.c.h.b16 %v1105
  %v1121 = vunpack.c.l.b16 %v1106
  %v1122 = vunpack.c.h.b16 %v1106
  %v1123 = vunpack.c.l.b16 %v1107
  %v1124 = vunpack.c.h.b16 %v1107
  %v1125 = vpack.c.b16 %v1119, %v1117
  %v1126 = vpack.c.b16 %v1120, %v1118
  %v1127 = vpack.c.b16 %v1123, %v1121
  %v1128 = vpack.c.b16 %v1124, %v1122
  %v1134 = vsel %vm171, %v1112, 0
  %1136 = vmatpush.bf16.msra.mxu0 0
  %1137 = vmatpush.bf16.msra.mxu0 0
  %1138 = vmatpush.bf16.msra.mxu0 0
  %1139 = vmatpush.bf16.msra.mxu0 0
  %1140 = vmatpush.bf16.msra.mxu0 0
  %1141 = vmatpush.bf16.msra.mxu0 0
  %1142 = vmatpush.bf16.msra.mxu0 %v1127
  %1143 = vmatpush.bf16.msra.mxu0 %v1125
  %1144 = vmatmul.bf16.gmra.mxu0 %v182
  %v1145 = vpop.f32.mrf.mxu0
  %v1146 = vadd.f32 0.0, %v1145
  %v1147 = vpop.f32.mrf.mxu0
  %v1148 = vadd.f32 0.0, %v1147
  %1149 = vmatmul.bf16.gmra.mxu0 %v185
  %v1150 = vpop.f32.mrf.mxu0
  %v1151 = vadd.f32 0.0, %v1150
  %v1152 = vpop.f32.mrf.mxu0
  %v1153 = vadd.f32 0.0, %v1152
  %1154 = vmatmul.bf16.gmra.mxu0 %v188
  %v1155 = vpop.f32.mrf.mxu0
  %v1156 = vadd.f32 0.0, %v1155
  %v1157 = vpop.f32.mrf.mxu0
  %v1158 = vadd.f32 0.0, %v1157
  %1159 = vmatmul.bf16.gmra.mxu0 %v191
  %v1160 = vpop.f32.mrf.mxu0
  %v1161 = vadd.f32 0.0, %v1160
  %v1162 = vpop.f32.mrf.mxu0
  %v1163 = vadd.f32 0.0, %v1162
  %1164 = vmatmul.bf16.gmra.mxu0 %v194
  %v1165 = vpop.f32.mrf.mxu0
  %v1166 = vadd.f32 0.0, %v1165
  %v1167 = vpop.f32.mrf.mxu0
  %v1168 = vadd.f32 0.0, %v1167
  %1169 = vmatmul.bf16.gmra.mxu0 %v197
  %v1170 = vpop.f32.mrf.mxu0
  %v1171 = vadd.f32 0.0, %v1170
  %v1172 = vpop.f32.mrf.mxu0
  %v1173 = vadd.f32 0.0, %v1172
  %1174 = vmatmul.bf16.gmra.mxu0 %v200
  %v1175 = vpop.f32.mrf.mxu0
  %v1176 = vadd.f32 0.0, %v1175
  %v1177 = vpop.f32.mrf.mxu0
  %v1178 = vadd.f32 0.0, %v1177
  %1179 = vmatmul.bf16.gmra.mxu0 %v203
  %v1180 = vpop.f32.mrf.mxu0
  %v1181 = vadd.f32 0.0, %v1180
  %v1182 = vpop.f32.mrf.mxu0
  %v1183 = vadd.f32 0.0, %v1182
  %1184 = vmatmul.bf16.gmra.mxu0 %v206
  %v1185 = vpop.f32.mrf.mxu0
  %v1186 = vadd.f32 0.0, %v1185
  %v1187 = vpop.f32.mrf.mxu0
  %v1188 = vadd.f32 0.0, %v1187
  %1189 = vmatmul.bf16.gmra.mxu0 %v209
  %v1190 = vpop.f32.mrf.mxu0
  %v1191 = vadd.f32 0.0, %v1190
  %v1192 = vpop.f32.mrf.mxu0
  %v1193 = vadd.f32 0.0, %v1192
  %1194 = vmatmul.bf16.gmra.mxu0 %v212
  %v1195 = vpop.f32.mrf.mxu0
  %v1196 = vadd.f32 0.0, %v1195
  %v1197 = vpop.f32.mrf.mxu0
  %v1198 = vadd.f32 0.0, %v1197
  %1199 = vmatmul.bf16.gmra.mxu0 %v215
  %v1200 = vpop.f32.mrf.mxu0
  %v1201 = vadd.f32 0.0, %v1200
  %v1202 = vpop.f32.mrf.mxu0
  %v1203 = vadd.f32 0.0, %v1202
  %1204 = vmatmul.bf16.gmra.mxu0 %v612
  %v1205 = vpop.f32.mrf.mxu0
  %v1206 = vadd.f32 0.0, %v1205
  %v1207 = vpop.f32.mrf.mxu0
  %v1208 = vadd.f32 0.0, %v1207
  %1209 = vmatmul.bf16.gmra.mxu0 %v873
  %v1210 = vpop.f32.mrf.mxu0
  %v1211 = vadd.f32 0.0, %v1210
  %v1212 = vpop.f32.mrf.mxu0
  %v1213 = vadd.f32 0.0, %v1212
  %1214 = vmatmul.bf16.gmra.mxu0 %v1134
  %v1215 = vpop.f32.mrf.mxu0
  %v1216 = vadd.f32 0.0, %v1215
  %v1217 = vpop.f32.mrf.mxu0
  %v1218 = vadd.f32 0.0, %v1217
  %1219 = vdwg.mxu0
  %1220 = vmatpush.bf16.msra.mxu0 0
  %1221 = vmatpush.bf16.msra.mxu0 0
  %1222 = vmatpush.bf16.msra.mxu0 0
  %1223 = vmatpush.bf16.msra.mxu0 0
  %1224 = vmatpush.bf16.msra.mxu0 0
  %1225 = vmatpush.bf16.msra.mxu0 0
  %1226 = vmatpush.bf16.msra.mxu0 %v1128
  %1227 = vmatpush.bf16.msra.mxu0 %v1126
  %1228 = vmatmul.bf16.gmra.mxu0 %v182
  %v1229 = vpop.f32.mrf.mxu0
  %v1230 = vadd.f32 0.0, %v1229
  %v1231 = vpop.f32.mrf.mxu0
  %v1232 = vadd.f32 0.0, %v1231
  %1233 = vmatmul.bf16.gmra.mxu0 %v185
  %v1234 = vpop.f32.mrf.mxu0
  %v1235 = vadd.f32 0.0, %v1234
  %v1236 = vpop.f32.mrf.mxu0
  %v1237 = vadd.f32 0.0, %v1236
  %1238 = vmatmul.bf16.gmra.mxu0 %v188
  %v1239 = vpop.f32.mrf.mxu0
  %v1240 = vadd.f32 0.0, %v1239
  %v1241 = vpop.f32.mrf.mxu0
  %v1242 = vadd.f32 0.0, %v1241
  %1243 = vmatmul.bf16.gmra.mxu0 %v191
  %v1244 = vpop.f32.mrf.mxu0
  %v1245 = vadd.f32 0.0, %v1244
  %v1246 = vpop.f32.mrf.mxu0
  %v1247 = vadd.f32 0.0, %v1246
  %1248 = vmatmul.bf16.gmra.mxu0 %v194
  %v1249 = vpop.f32.mrf.mxu0
  %v1250 = vadd.f32 0.0, %v1249
  %v1251 = vpop.f32.mrf.mxu0
  %v1252 = vadd.f32 0.0, %v1251
  %1253 = vmatmul.bf16.gmra.mxu0 %v197
  %v1254 = vpop.f32.mrf.mxu0
  %v1255 = vadd.f32 0.0, %v1254
  %v1256 = vpop.f32.mrf.mxu0
  %v1257 = vadd.f32 0.0, %v1256
  %1258 = vmatmul.bf16.gmra.mxu0 %v200
  %v1259 = vpop.f32.mrf.mxu0
  %v1260 = vadd.f32 0.0, %v1259
  %v1261 = vpop.f32.mrf.mxu0
  %v1262 = vadd.f32 0.0, %v1261
  %1263 = vmatmul.bf16.gmra.mxu0 %v203
  %v1264 = vpop.f32.mrf.mxu0
  %v1265 = vadd.f32 0.0, %v1264
  %v1266 = vpop.f32.mrf.mxu0
  %v1267 = vadd.f32 0.0, %v1266
  %1268 = vmatmul.bf16.gmra.mxu0 %v206
  %v1269 = vpop.f32.mrf.mxu0
  %v1270 = vadd.f32 0.0, %v1269
  %v1271 = vpop.f32.mrf.mxu0
  %v1272 = vadd.f32 0.0, %v1271
  %1273 = vmatmul.bf16.gmra.mxu0 %v209
  %v1274 = vpop.f32.mrf.mxu0
  %v1275 = vadd.f32 0.0, %v1274
  %v1276 = vpop.f32.mrf.mxu0
  %v1277 = vadd.f32 0.0, %v1276
  %1278 = vmatmul.bf16.gmra.mxu0 %v212
  %v1279 = vpop.f32.mrf.mxu0
  %v1280 = vadd.f32 0.0, %v1279
  %v1281 = vpop.f32.mrf.mxu0
  %v1282 = vadd.f32 0.0, %v1281
  %1283 = vmatmul.bf16.gmra.mxu0 %v215
  %v1284 = vpop.f32.mrf.mxu0
  %v1285 = vadd.f32 0.0, %v1284
  %v1286 = vpop.f32.mrf.mxu0
  %v1287 = vadd.f32 0.0, %v1286
  %1288 = vmatmul.bf16.gmra.mxu0 %v612
  %v1289 = vpop.f32.mrf.mxu0
  %v1290 = vadd.f32 0.0, %v1289
  %v1291 = vpop.f32.mrf.mxu0
  %v1292 = vadd.f32 0.0, %v1291
  %1293 = vmatmul.bf16.gmra.mxu0 %v873
  %v1294 = vpop.f32.mrf.mxu0
  %v1295 = vadd.f32 0.0, %v1294
  %v1296 = vpop.f32.mrf.mxu0
  %v1297 = vadd.f32 0.0, %v1296
  %1298 = vmatmul.bf16.gmra.mxu0 %v1134
  %v1299 = vpop.f32.mrf.mxu0
  %v1300 = vadd.f32 0.0, %v1299
  %v1301 = vpop.f32.mrf.mxu0
  %v1302 = vadd.f32 0.0, %v1301
  %1303 = vdwg.mxu0
  %v1304 = vadd.f32 %v1043, %v1146
  %v1305 = vadd.f32 %v1044, %v1230
  %v1306 = vadd.f32 %v1045, %v1148
  %v1307 = vadd.f32 %v1046, %v1232
  %v1308 = vadd.f32 %v1047, %v1151
  %v1309 = vadd.f32 %v1048, %v1235
  %v1310 = vadd.f32 %v1049, %v1153
  %v1311 = vadd.f32 %v1050, %v1237
  %v1312 = vadd.f32 %v1051, %v1156
  %v1313 = vadd.f32 %v1052, %v1240
  %v1314 = vadd.f32 %v1053, %v1158
  %v1315 = vadd.f32 %v1054, %v1242
  %v1316 = vadd.f32 %v1055, %v1161
  %v1317 = vadd.f32 %v1056, %v1245
  %v1318 = vadd.f32 %v1057, %v1163
  %v1319 = vadd.f32 %v1058, %v1247
  %v1320 = vadd.f32 %v1059, %v1166
  %v1321 = vadd.f32 %v1060, %v1250
  %v1322 = vadd.f32 %v1061, %v1168
  %v1323 = vadd.f32 %v1062, %v1252
  %v1324 = vadd.f32 %v1063, %v1171
  %v1325 = vadd.f32 %v1064, %v1255
  %v1326 = vadd.f32 %v1065, %v1173
  %v1327 = vadd.f32 %v1066, %v1257
  %v1328 = vadd.f32 %v1067, %v1176
  %v1329 = vadd.f32 %v1068, %v1260
  %v1330 = vadd.f32 %v1069, %v1178
  %v1331 = vadd.f32 %v1070, %v1262
  %v1332 = vadd.f32 %v1071, %v1181
  %v1333 = vadd.f32 %v1072, %v1265
  %v1334 = vadd.f32 %v1073, %v1183
  %v1335 = vadd.f32 %v1074, %v1267
  %v1336 = vadd.f32 %v1075, %v1186
  %v1337 = vadd.f32 %v1076, %v1270
  %v1338 = vadd.f32 %v1077, %v1188
  %v1339 = vadd.f32 %v1078, %v1272
  %v1340 = vadd.f32 %v1079, %v1191
  %v1341 = vadd.f32 %v1080, %v1275
  %v1342 = vadd.f32 %v1081, %v1193
  %v1343 = vadd.f32 %v1082, %v1277
  %v1344 = vadd.f32 %v1083, %v1196
  %v1345 = vadd.f32 %v1084, %v1280
  %v1346 = vadd.f32 %v1085, %v1198
  %v1347 = vadd.f32 %v1086, %v1282
  %v1348 = vadd.f32 %v1087, %v1201
  %v1349 = vadd.f32 %v1088, %v1285
  %v1350 = vadd.f32 %v1089, %v1203
  %v1351 = vadd.f32 %v1090, %v1287
  %v1352 = vadd.f32 %v1091, %v1206
  %v1353 = vadd.f32 %v1092, %v1290
  %v1354 = vadd.f32 %v1093, %v1208
  %v1355 = vadd.f32 %v1094, %v1292
  %v1356 = vadd.f32 %v1095, %v1211
  %v1357 = vadd.f32 %v1096, %v1295
  %v1358 = vadd.f32 %v1097, %v1213
  %v1359 = vadd.f32 %v1098, %v1297
  %v1360 = vadd.f32 %v1099, %v1216
  %v1361 = vadd.f32 %v1100, %v1300
  %v1362 = vadd.f32 %v1101, %v1218
  %v1363 = vadd.f32 %v1102, %v1302
  %v1364 = vld [vmem:[%s2] sm:$0x3]
  %v1366 = vperm.slane %v1364, 0
  %v1367 = vperm.slane %v1364, 1
  %v1370 = vmul.f32 %v1304, %v1366
  %v1371 = vmul.f32 %v1305, %v1367
  %v1372 = vmul.f32 %v1306, %v1366
  %v1373 = vmul.f32 %v1307, %v1367
  %v1374 = vmul.f32 %v1308, %v1366
  %v1375 = vmul.f32 %v1309, %v1367
  %v1376 = vmul.f32 %v1310, %v1366
  %v1377 = vmul.f32 %v1311, %v1367
  %v1378 = vmul.f32 %v1312, %v1366
  %v1379 = vmul.f32 %v1313, %v1367
  %v1380 = vmul.f32 %v1314, %v1366
  %v1381 = vmul.f32 %v1315, %v1367
  %v1382 = vmul.f32 %v1316, %v1366
  %v1383 = vmul.f32 %v1317, %v1367
  %v1384 = vmul.f32 %v1318, %v1366
  %v1385 = vmul.f32 %v1319, %v1367
  %v1386 = vmul.f32 %v1320, %v1366
  %v1387 = vmul.f32 %v1321, %v1367
  %v1388 = vmul.f32 %v1322, %v1366
  %v1389 = vmul.f32 %v1323, %v1367
  %v1390 = vmul.f32 %v1324, %v1366
  %v1391 = vmul.f32 %v1325, %v1367
  %v1392 = vmul.f32 %v1326, %v1366
  %v1393 = vmul.f32 %v1327, %v1367
  %v1394 = vmul.f32 %v1328, %v1366
  %v1395 = vmul.f32 %v1329, %v1367
  %v1396 = vmul.f32 %v1330, %v1366
  %v1397 = vmul.f32 %v1331, %v1367
  %v1398 = vmul.f32 %v1332, %v1366
  %v1399 = vmul.f32 %v1333, %v1367
  %v1400 = vmul.f32 %v1334, %v1366
  %v1401 = vmul.f32 %v1335, %v1367
  %v1402 = vmul.f32 %v1336, %v1366
  %v1403 = vmul.f32 %v1337, %v1367
  %v1404 = vmul.f32 %v1338, %v1366
  %v1405 = vmul.f32 %v1339, %v1367
  %v1406 = vmul.f32 %v1340, %v1366
  %v1407 = vmul.f32 %v1341, %v1367
  %v1408 = vmul.f32 %v1342, %v1366
  %v1409 = vmul.f32 %v1343, %v1367
  %v1410 = vmul.f32 %v1344, %v1366
  %v1411 = vmul.f32 %v1345, %v1367
  %v1412 = vmul.f32 %v1346, %v1366
  %v1413 = vmul.f32 %v1347, %v1367
  %v1414 = vmul.f32 %v1348, %v1366
  %v1415 = vmul.f32 %v1349, %v1367
  %v1416 = vmul.f32 %v1350, %v1366
  %v1417 = vmul.f32 %v1351, %v1367
  %v1418 = vmul.f32 %v1352, %v1366
  %v1419 = vmul.f32 %v1353, %v1367
  %v1420 = vmul.f32 %v1354, %v1366
  %v1421 = vmul.f32 %v1355, %v1367
  %v1422 = vmul.f32 %v1356, %v1366
  %v1423 = vmul.f32 %v1357, %v1367
  %v1424 = vmul.f32 %v1358, %v1366
  %v1425 = vmul.f32 %v1359, %v1367
  %v1426 = vmul.f32 %v1360, %v1366
  %v1427 = vmul.f32 %v1361, %v1367
  %v1428 = vmul.f32 %v1362, %v1366
  %v1429 = vmul.f32 %v1363, %v1367
  %v1430 = vld [vmem:[%s3] sm:$0x3]
  %v1432 = vperm.slane %v1430, 0
  %v1433 = vperm.slane %v1430, 1
  %v1436 = vadd.f32 %v1370, %v1432
  %v1437 = vadd.f32 %v1371, %v1433
  %v1438 = vadd.f32 %v1372, %v1432
  %v1439 = vadd.f32 %v1373, %v1433
  %v1440 = vadd.f32 %v1374, %v1432
  %v1441 = vadd.f32 %v1375, %v1433
  %v1442 = vadd.f32 %v1376, %v1432
  %v1443 = vadd.f32 %v1377, %v1433
  %v1444 = vadd.f32 %v1378, %v1432
  %v1445 = vadd.f32 %v1379, %v1433
  %v1446 = vadd.f32 %v1380, %v1432
  %v1447 = vadd.f32 %v1381, %v1433
  %v1448 = vadd.f32 %v1382, %v1432
  %v1449 = vadd.f32 %v1383, %v1433
  %v1450 = vadd.f32 %v1384, %v1432
  %v1451 = vadd.f32 %v1385, %v1433
  %v1452 = vadd.f32 %v1386, %v1432
  %v1453 = vadd.f32 %v1387, %v1433
  %v1454 = vadd.f32 %v1388, %v1432
  %v1455 = vadd.f32 %v1389, %v1433
  %v1456 = vadd.f32 %v1390, %v1432
  %v1457 = vadd.f32 %v1391, %v1433
  %v1458 = vadd.f32 %v1392, %v1432
  %v1459 = vadd.f32 %v1393, %v1433
  %v1460 = vadd.f32 %v1394, %v1432
  %v1461 = vadd.f32 %v1395, %v1433
  %v1462 = vadd.f32 %v1396, %v1432
  %v1463 = vadd.f32 %v1397, %v1433
  %v1464 = vadd.f32 %v1398, %v1432
  %v1465 = vadd.f32 %v1399, %v1433
  %v1466 = vadd.f32 %v1400, %v1432
  %v1467 = vadd.f32 %v1401, %v1433
  %v1468 = vadd.f32 %v1402, %v1432
  %v1469 = vadd.f32 %v1403, %v1433
  %v1470 = vadd.f32 %v1404, %v1432
  %v1471 = vadd.f32 %v1405, %v1433
  %v1472 = vadd.f32 %v1406, %v1432
  %v1473 = vadd.f32 %v1407, %v1433
  %v1474 = vadd.f32 %v1408, %v1432
  %v1475 = vadd.f32 %v1409, %v1433
  %v1476 = vadd.f32 %v1410, %v1432
  %v1477 = vadd.f32 %v1411, %v1433
  %v1478 = vadd.f32 %v1412, %v1432
  %v1479 = vadd.f32 %v1413, %v1433
  %v1480 = vadd.f32 %v1414, %v1432
  %v1481 = vadd.f32 %v1415, %v1433
  %v1482 = vadd.f32 %v1416, %v1432
  %v1483 = vadd.f32 %v1417, %v1433
  %v1484 = vadd.f32 %v1418, %v1432
  %v1485 = vadd.f32 %v1419, %v1433
  %v1486 = vadd.f32 %v1420, %v1432
  %v1487 = vadd.f32 %v1421, %v1433
  %v1488 = vadd.f32 %v1422, %v1432
  %v1489 = vadd.f32 %v1423, %v1433
  %v1490 = vadd.f32 %v1424, %v1432
  %v1491 = vadd.f32 %v1425, %v1433
  %v1492 = vadd.f32 %v1426, %v1432
  %v1493 = vadd.f32 %v1427, %v1433
  %v1494 = vadd.f32 %v1428, %v1432
  %v1495 = vadd.f32 %v1429, %v1433
  %v1496 = vmax.f32 %v1436, 0.0
  %v1497 = vmax.f32 %v1437, 0.0
  %v1498 = vmax.f32 %v1438, 0.0
  %v1499 = vmax.f32 %v1439, 0.0
  %v1500 = vmax.f32 %v1440, 0.0
  %v1501 = vmax.f32 %v1441, 0.0
  %v1502 = vmax.f32 %v1442, 0.0
  %v1503 = vmax.f32 %v1443, 0.0
  %v1504 = vmax.f32 %v1444, 0.0
  %v1505 = vmax.f32 %v1445, 0.0
  %v1506 = vmax.f32 %v1446, 0.0
  %v1507 = vmax.f32 %v1447, 0.0
  %v1508 = vmax.f32 %v1448, 0.0
  %v1509 = vmax.f32 %v1449, 0.0
  %v1510 = vmax.f32 %v1450, 0.0
  %v1511 = vmax.f32 %v1451, 0.0
  %v1512 = vmax.f32 %v1452, 0.0
  %v1513 = vmax.f32 %v1453, 0.0
  %v1514 = vmax.f32 %v1454, 0.0
  %v1515 = vmax.f32 %v1455, 0.0
  %v1516 = vmax.f32 %v1456, 0.0
  %v1517 = vmax.f32 %v1457, 0.0
  %v1518 = vmax.f32 %v1458, 0.0
  %v1519 = vmax.f32 %v1459, 0.0
  %v1520 = vmax.f32 %v1460, 0.0
  %v1521 = vmax.f32 %v1461, 0.0
  %v1522 = vmax.f32 %v1462, 0.0
  %v1523 = vmax.f32 %v1463, 0.0
  %v1524 = vmax.f32 %v1464, 0.0
  %v1525 = vmax.f32 %v1465, 0.0
  %v1526 = vmax.f32 %v1466, 0.0
  %v1527 = vmax.f32 %v1467, 0.0
  %v1528 = vmax.f32 %v1468, 0.0
  %v1529 = vmax.f32 %v1469, 0.0
  %v1530 = vmax.f32 %v1470, 0.0
  %v1531 = vmax.f32 %v1471, 0.0
  %v1532 = vmax.f32 %v1472, 0.0
  %v1533 = vmax.f32 %v1473, 0.0
  %v1534 = vmax.f32 %v1474, 0.0
  %v1535 = vmax.f32 %v1475, 0.0
  %v1536 = vmax.f32 %v1476, 0.0
  %v1537 = vmax.f32 %v1477, 0.0
  %v1538 = vmax.f32 %v1478, 0.0
  %v1539 = vmax.f32 %v1479, 0.0
  %v1540 = vmax.f32 %v1480, 0.0
  %v1541 = vmax.f32 %v1481, 0.0
  %v1542 = vmax.f32 %v1482, 0.0
  %v1543 = vmax.f32 %v1483, 0.0
  %v1544 = vmax.f32 %v1484, 0.0
  %v1545 = vmax.f32 %v1485, 0.0
  %v1546 = vmax.f32 %v1486, 0.0
  %v1547 = vmax.f32 %v1487, 0.0
  %v1548 = vmax.f32 %v1488, 0.0
  %v1549 = vmax.f32 %v1489, 0.0
  %v1550 = vmax.f32 %v1490, 0.0
  %v1551 = vmax.f32 %v1491, 0.0
  %v1552 = vmax.f32 %v1492, 0.0
  %v1553 = vmax.f32 %v1493, 0.0
  %v1554 = vmax.f32 %v1494, 0.0
  %v1555 = vmax.f32 %v1495, 0.0
  %v1556 = vld [vmem:[%s4] sm:$0x3]
  %v1557 = vld [vmem:[%s4 + $0x2] sm:$0x3]
  %v1558 = vld [vmem:[%s4 + $0x4] sm:$0x3]
  %v1559 = vld [vmem:[%s4 + $0x6] sm:$0x3]
  %v1560 = vld [vmem:[%s4 + $0x8] sm:$0x3]
  %v1561 = vld [vmem:[%s4 + $0xa] sm:$0x3]
  %v1562 = vld [vmem:[%s4 + $0xc] sm:$0x3]
  %v1563 = vld [vmem:[%s4 + $0xe] sm:$0x3]
  %v1564 = vld [vmem:[%s4 + $0x10] sm:$0x3]
  %v1565 = vld [vmem:[%s4 + $0x12] sm:$0x3]
  %v1566 = vld [vmem:[%s4 + $0x14] sm:$0x3]
  %v1567 = vld [vmem:[%s4 + $0x16] sm:$0x3]
  %v1568 = vld [vmem:[%s4 + $0x18] sm:$0x3]
  %v1569 = vld [vmem:[%s4 + $0x1a] sm:$0x3]
  %v1570 = vld [vmem:[%s4 + $0x1c] sm:$0x3]
  %v1586 = vperm.slane %v1556, 0
  %v1587 = vperm.slane %v1556, 1
  %v1588 = vperm.slane %v1557, 0
  %v1589 = vperm.slane %v1557, 1
  %v1590 = vperm.slane %v1558, 0
  %v1591 = vperm.slane %v1558, 1
  %v1592 = vperm.slane %v1559, 0
  %v1593 = vperm.slane %v1559, 1
  %v1594 = vperm.slane %v1560, 0
  %v1595 = vperm.slane %v1560, 1
  %v1596 = vperm.slane %v1561, 0
  %v1597 = vperm.slane %v1561, 1
  %v1598 = vperm.slane %v1562, 0
  %v1599 = vperm.slane %v1562, 1
  %v1600 = vperm.slane %v1563, 0
  %v1601 = vperm.slane %v1563, 1
  %v1602 = vperm.slane %v1564, 0
  %v1603 = vperm.slane %v1564, 1
  %v1604 = vperm.slane %v1565, 0
  %v1605 = vperm.slane %v1565, 1
  %v1606 = vperm.slane %v1566, 0
  %v1607 = vperm.slane %v1566, 1
  %v1608 = vperm.slane %v1567, 0
  %v1609 = vperm.slane %v1567, 1
  %v1610 = vperm.slane %v1568, 0
  %v1611 = vperm.slane %v1568, 1
  %v1612 = vperm.slane %v1569, 0
  %v1613 = vperm.slane %v1569, 1
  %v1614 = vperm.slane %v1570, 0
  %v1615 = vperm.slane %v1570, 1
  %v1646 = vmul.f32 %v1496, %v1586
  %v1647 = vmul.f32 %v1497, %v1587
  %v1648 = vmul.f32 %v1498, %v1586
  %v1649 = vmul.f32 %v1499, %v1587
  %v1650 = vmul.f32 %v1500, %v1588
  %v1651 = vmul.f32 %v1501, %v1589
  %v1652 = vmul.f32 %v1502, %v1588
  %v1653 = vmul.f32 %v1503, %v1589
  %v1654 = vmul.f32 %v1504, %v1590
  %v1655 = vmul.f32 %v1505, %v1591
  %v1656 = vmul.f32 %v1506, %v1590
  %v1657 = vmul.f32 %v1507, %v1591
  %v1658 = vmul.f32 %v1508, %v1592
  %v1659 = vmul.f32 %v1509, %v1593
  %v1660 = vmul.f32 %v1510, %v1592
  %v1661 = vmul.f32 %v1511, %v1593
  %v1662 = vmul.f32 %v1512, %v1594
  %v1663 = vmul.f32 %v1513, %v1595
  %v1664 = vmul.f32 %v1514, %v1594
  %v1665 = vmul.f32 %v1515, %v1595
  %v1666 = vmul.f32 %v1516, %v1596
  %v1667 = vmul.f32 %v1517, %v1597
  %v1668 = vmul.f32 %v1518, %v1596
  %v1669 = vmul.f32 %v1519, %v1597
  %v1670 = vmul.f32 %v1520, %v1598
  %v1671 = vmul.f32 %v1521, %v1599
  %v1672 = vmul.f32 %v1522, %v1598
  %v1673 = vmul.f32 %v1523, %v1599
  %v1674 = vmul.f32 %v1524, %v1600
  %v1675 = vmul.f32 %v1525, %v1601
  %v1676 = vmul.f32 %v1526, %v1600
  %v1677 = vmul.f32 %v1527, %v1601
  %v1678 = vmul.f32 %v1528, %v1602
  %v1679 = vmul.f32 %v1529, %v1603
  %v1680 = vmul.f32 %v1530, %v1602
  %v1681 = vmul.f32 %v1531, %v1603
  %v1682 = vmul.f32 %v1532, %v1604
  %v1683 = vmul.f32 %v1533, %v1605
  %v1684 = vmul.f32 %v1534, %v1604
  %v1685 = vmul.f32 %v1535, %v1605
  %v1686 = vmul.f32 %v1536, %v1606
  %v1687 = vmul.f32 %v1537, %v1607
  %v1688 = vmul.f32 %v1538, %v1606
  %v1689 = vmul.f32 %v1539, %v1607
  %v1690 = vmul.f32 %v1540, %v1608
  %v1691 = vmul.f32 %v1541, %v1609
  %v1692 = vmul.f32 %v1542, %v1608
  %v1693 = vmul.f32 %v1543, %v1609
  %v1694 = vmul.f32 %v1544, %v1610
  %v1695 = vmul.f32 %v1545, %v1611
  %v1696 = vmul.f32 %v1546, %v1610
  %v1697 = vmul.f32 %v1547, %v1611
  %v1698 = vmul.f32 %v1548, %v1612
  %v1699 = vmul.f32 %v1549, %v1613
  %v1700 = vmul.f32 %v1550, %v1612
  %v1701 = vmul.f32 %v1551, %v1613
  %v1702 = vmul.f32 %v1552, %v1614
  %v1703 = vmul.f32 %v1553, %v1615
  %v1704 = vmul.f32 %v1554, %v1614
  %v1705 = vmul.f32 %v1555, %v1615
  %v1706 = vmax.f32 %v1646, %v1650
  %v1707 = vmax.f32 %v1706, %v1654
  %v1708 = vmax.f32 %v1707, %v1658
  %v1709 = vmax.f32 %v1708, %v1662
  %v1710 = vmax.f32 %v1709, %v1666
  %v1711 = vmax.f32 %v1710, %v1670
  %v1712 = vmax.f32 %v1711, %v1674
  %v1713 = vmax.f32 %v1712, %v1678
  %v1714 = vmax.f32 %v1713, %v1682
  %v1715 = vmax.f32 %v1714, %v1686
  %v1716 = vmax.f32 %v1715, %v1690
  %v1717 = vmax.f32 %v1716, %v1694
  %v1718 = vmax.f32 %v1717, %v1698
  %v1719 = vmax.f32 %v1718, %v1702
  %v1720 = vmax.f32 %v1647, %v1651
  %v1721 = vmax.f32 %v1720, %v1655
  %v1722 = vmax.f32 %v1721, %v1659
  %v1723 = vmax.f32 %v1722, %v1663
  %v1724 = vmax.f32 %v1723, %v1667
  %v1725 = vmax.f32 %v1724, %v1671
  %v1726 = vmax.f32 %v1725, %v1675
  %v1727 = vmax.f32 %v1726, %v1679
  %v1728 = vmax.f32 %v1727, %v1683
  %v1729 = vmax.f32 %v1728, %v1687
  %v1730 = vmax.f32 %v1729, %v1691
  %v1731 = vmax.f32 %v1730, %v1695
  %v1732 = vmax.f32 %v1731, %v1699
  %v1733 = vmax.f32 %v1732, %v1703
  %v1734 = vmax.f32 %v1648, %v1652
  %v1735 = vmax.f32 %v1734, %v1656
  %v1736 = vmax.f32 %v1735, %v1660
  %v1737 = vmax.f32 %v1736, %v1664
  %v1738 = vmax.f32 %v1737, %v1668
  %v1739 = vmax.f32 %v1738, %v1672
  %v1740 = vmax.f32 %v1739, %v1676
  %v1741 = vmax.f32 %v1740, %v1680
  %v1742 = vmax.f32 %v1741, %v1684
  %v1743 = vmax.f32 %v1742, %v1688
  %v1744 = vmax.f32 %v1743, %v1692
  %v1745 = vmax.f32 %v1744, %v1696
  %v1746 = vmax.f32 %v1745, %v1700
  %v1747 = vmax.f32 %v1746, %v1704
  %v1748 = vmax.f32 %v1649, %v1653
  %v1749 = vmax.f32 %v1748, %v1657
  %v1750 = vmax.f32 %v1749, %v1661
  %v1751 = vmax.f32 %v1750, %v1665
  %v1752 = vmax.f32 %v1751, %v1669
  %v1753 = vmax.f32 %v1752, %v1673
  %v1754 = vmax.f32 %v1753, %v1677
  %v1755 = vmax.f32 %v1754, %v1681
  %v1756 = vmax.f32 %v1755, %v1685
  %v1757 = vmax.f32 %v1756, %v1689
  %v1758 = vmax.f32 %v1757, %v1693
  %v1759 = vmax.f32 %v1758, %v1697
  %v1760 = vmax.f32 %v1759, %v1701
  %v1761 = vmax.f32 %v1760, %v1705
  %v1762 = vld [vmem:[%s5] sm:$0x3]
  %v1764 = vperm.slane %v1762, 0
  %v1765 = vperm.slane %v1762, 1
  %v1768 = vmul.f32 %v1719, %v1764
  %v1769 = vmul.f32 %v1733, %v1765
  %v1770 = vmul.f32 %v1747, %v1764
  %v1771 = vmul.f32 %v1761, %v1765
  %v1772 = vadd.f32 %v1768, %v1769
  %1773 = vadd.xlane.f32.xlu0 %v1772
  %v1774 = vpop.xlane.xlu0 %1773
  %v1775 = vadd.f32 %v1770, %v1771
  %1776 = vadd.xlane.f32.xlu0 %v1775
  %v1777 = vpop.xlane.xlu0 %1776
  %v1778 = vld [vmem:[#allocation2] sm:$0x1]
  %v1780 = vperm.slane %v1778, 0
  %v1782 = vadd.f32 %v1774, %v1780
  %v1783 = vadd.f32 %v1777, %v1780
  %vm1784 = vcmask 7168
  %1785 = vst.msk [vmem:[%s7] sm:$0xff] %vm1784, %v1782
  %1786 = vst.msk [vmem:[%s7 + $0x8] sm:$0xff] %vm1784, %v1783
  // Predicated region
  $region30: #{forward.1} parent=0 // pred_check
    _
  $region31: #{forward.1} parent=0 // pred_check_branch
    %1788 = sbr.rel (0) target = $region33
  $region32: #{forward.1} parent=0 // pred_region
    _
  $region33: #{forward.1} parent=0 // pred_fallthru
    _
  // Predicated region
  $region34: #{forward.1} parent=0 // pred_check
    _
  $region35: #{forward.1} parent=0 // pred_check_branch
    %1790 = sbr.rel (0) target = $region37
  $region36: #{forward.1} parent=0 // pred_region
    _
  $region37: #{forward.1} parent=0 // pred_fallthru
    _

</llo_original>
